<compile_context>
chip_gen: v6e
topology: v6e:2x2x1
jax: 0.10.0
libtpu: 0.0.40
codegen_flags: <defaults>
</compile_context>

<pallas_src>
import functools

import jax
import jax.numpy as jnp
from jax.experimental import pallas as pl
from jax.experimental.pallas import tpu as pltpu

EPS = 1e-5
_VMEM_LIMIT = 32 * 1024 * 1024  # explicit scoped-VMEM budget, safe on v5e/v6e/v7x


def _pick_row_block(h):
    """Row-tile size: multiple of 8, divides H, keeps >=2 blocks when possible."""
    assert h % 8 == 0, "this kernel assumes H is a multiple of 8"
    cap = max(8, min(256, h // 2))
    th = 8
    for cand in range(8, cap + 1, 8):
        if h % cand == 0:
            th = cand
    return th


def _conv_stage_kernel(xm_ref, xt_ref, xb_ref, w_ref, s_ref, b_ref,
                       y_ref, st_ref, xs_ref, *, th, nhb, apply_pre):
    """One (batch, row-block) tile:
         [optional fused BN+ReLU of the producer stage] -> zero-padded 3x3 conv
         -> raw conv output + per-tile BN partial sums.

    Shapes (K = W*Cin, M = W*Cout):
      xm_ref : [th, K]   rows [hb*th, hb*th+th) of the input (lane-dense)
      xt_ref : [8,  K]   8-row-aligned block whose last row is row hb*th-1
      xb_ref : [8,  K]   8-row-aligned block whose first row is row hb*th+th
      w_ref  : [3, K, M] block-Toeplitz conv weights (bf16), one matrix per ky
      s_ref/b_ref : [1, K] producer-BN scale/bias tiled over W (used if apply_pre)
      y_ref  : [th, M]   raw (pre-BN) conv output
      st_ref : [2, M]    per-tile [sum, sum-of-squares] over rows
      xs_ref : [th+2, K] f32 scratch: halo-extended, pre-processed input rows
    """
    hb = pl.program_id(1)

    def prep(v):
        if apply_pre:
            # Fused BatchNorm+ReLU of the previous conv stage: one FMA + max.
            v = jnp.maximum(v * s_ref[...] + b_ref[...], 0.0)
        return v

    zero_row = jnp.zeros((1, xs_ref.shape[1]), xs_ref.dtype)
    xs_ref[1:th + 1, :] = prep(xm_ref[...])
    # Row halos; at the image top/bottom they become the conv's zero padding.
    xs_ref[0:1, :] = jnp.where(hb == 0, zero_row, prep(xt_ref[7:8, :]))
    xs_ref[th + 1:th + 2, :] = jnp.where(hb == nhb - 1, zero_row, prep(xb_ref[0:1, :]))

    x = xs_ref[...].astype(jnp.bfloat16)        # bf16 into the MXU, f32 accumulate

    m = y_ref.shape[-1]
    acc = jnp.zeros((th, m), jnp.float32)
    for ky in range(3):                          # 3 MXU matmuls: K=W*Cin, N=W*Cout
        acc = acc + jnp.dot(x[ky:ky + th, :], w_ref[ky],
                            preferred_element_type=jnp.float32)

    # Per-tile partial BN statistics (reduced to per-channel outside the kernel).
    st_ref[0:1, :] = jnp.sum(acc, axis=0, keepdims=True)
    st_ref[1:2, :] = jnp.sum(acc * acc, axis=0, keepdims=True)

    y_ref[...] = acc                             # raw conv output, lane-dense (W*Cout)


def _conv_stage(x, w_banded, pre_scale, pre_bias, *, h, w, cin, cout, th, apply_pre):
    """Tiled conv stage. x: [N, H, W*Cin] f32 -> (y [N,H,W*Cout] f32, stats)."""
    n = x.shape[0]
    k = w * cin
    m = w * cout
    nhb = h // th
    tb = th // 8
    hb8 = h // 8

    kernel = functools.partial(_conv_stage_kernel, th=th, nhb=nhb, apply_pre=apply_pre)

    y, stats = pl.pallas_call(
        kernel,
        grid=(n, nhb),
        in_specs=(
            # main rows of this tile (auto-pipelined / double-buffered)
            pl.BlockSpec((None, th, k), lambda i, j: (i, j, 0)),
            # 8-row-aligned blocks carrying the +/-1 row halos (clamped at the edges,
            # the invalid row is replaced by zero padding inside the kernel)
            pl.BlockSpec((None, 8, k),
                         lambda i, j: (i, jnp.maximum(j * tb - 1, 0), 0)),
            pl.BlockSpec((None, 8, k),
                         lambda i, j: (i, jnp.minimum(j * tb + tb, hb8 - 1), 0)),
            # grid-invariant operands (fetched once, not re-copied per step)
            pl.BlockSpec((3, k, m), lambda i, j: (0, 0, 0)),
            pl.BlockSpec((1, k), lambda i, j: (0, 0)),
            pl.BlockSpec((1, k), lambda i, j: (0, 0)),
        ),
        out_specs=(
            pl.BlockSpec((None, th, m), lambda i, j: (i, j, 0)),
            pl.BlockSpec((None, 2, m), lambda i, j: (i * nhb + j, 0, 0)),
        ),
        out_shape=(
            jax.ShapeDtypeStruct((n, h, m), jnp.float32),
            jax.ShapeDtypeStruct((n * nhb, 2, m), jnp.float32),
        ),
        scratch_shapes=[pltpu.VMEM((th + 2, k), jnp.float32)],
        compiler_params=pltpu.CompilerParams(
            dimension_semantics=("parallel", "parallel"),   # megacore-friendly on v7x
            vmem_limit_bytes=_VMEM_LIMIT,
        ),
    )(x, x, x, w_banded, pre_scale, pre_bias)
    return y, stats


def _bn_relu_kernel(y_ref, s_ref, b_ref, o_ref):
    # Single fused multiply-add + max per element, lane-dense width W*Cout.
    o_ref[...] = jnp.maximum(y_ref[...] * s_ref[...] + b_ref[...], 0.0)


def _bn_relu_apply(y, scale_full, bias_full, *, h, th):
    n, _, m = y.shape
    nhb = h // th
    return pl.pallas_call(
        _bn_relu_kernel,
        grid=(n, nhb),
        in_specs=(
            pl.BlockSpec((None, th, m), lambda i, j: (i, j, 0)),
            pl.BlockSpec((1, m), lambda i, j: (0, 0)),
            pl.BlockSpec((1, m), lambda i, j: (0, 0)),
        ),
        out_specs=pl.BlockSpec((None, th, m), lambda i, j: (i, j, 0)),
        out_shape=jax.ShapeDtypeStruct((n, h, m), jnp.float32),
        compiler_params=pltpu.CompilerParams(
            dimension_semantics=("parallel", "parallel"),
            vmem_limit_bytes=_VMEM_LIMIT,
        ),
    )(y, scale_full, bias_full)


def _banded_conv_weights(w_hwio, w):
    """[3,3,Cin,Cout] -> [3, W*Cin, W*Cout] block-Toeplitz matrices (one per ky).

    The W-axis zero padding is encoded by the band structure, so the kernel's matmul
    output is directly the lane-dense flattened [rows, W*Cout] layout."""
    w_in = jnp.arange(w)[:, None]
    w_out = jnp.arange(w)[None, :]
    kx = w_in - w_out + 1                          # which 3x3 column feeds w_in -> w_out
    valid = (kx >= 0) & (kx <= 2)
    g = w_hwio[:, jnp.clip(kx, 0, 2)]              # [3, W, W, Cin, Cout]
    g = jnp.where(valid[None, :, :, None, None], g, 0.0)
    cin, cout = w_hwio.shape[2], w_hwio.shape[3]
    banded = jnp.transpose(g, (0, 1, 3, 2, 4)).reshape(3, w * cin, w * cout)
    return banded.astype(jnp.bfloat16)


def _bn_scale_bias(stats, gamma, beta, count, w, c):
    """Per-tile partial sums -> per-channel BN scale/bias (training-mode batch stats,
    biased variance, eps=1e-5), folded into a single FMA."""
    tot = jnp.sum(stats, axis=0)                   # [2, W*C]
    tot = tot.reshape(2, w, c).sum(axis=1)         # [2, C]
    mean = tot[0] / count
    # E[x^2] - mean^2 with f32 accumulators; clamp tiny negatives from cancellation.
    var = jnp.maximum(tot[1] / count - mean * mean, 0.0)
    scale = gamma * jax.lax.rsqrt(var + EPS)
    bias = beta - mean * scale
    return scale, bias


@jax.jit
def basic_block_forward(x_nchw, params):
    n, c0, h, w = x_nchw.shape
    c1 = params["w1"].shape[-1]
    c2 = params["w2"].shape[-1]
    th = _pick_row_block(h)
    count = n * h * w

    # NCHW -> NHWC, flattened to [N, H, W*C] so the lane axis is W*C (lane-dense).
    x = jnp.transpose(x_nchw.astype(jnp.float32), (0, 2, 3, 1)).reshape(n, h, w * c0)

    b1 = _banded_conv_weights(params["w1"], w)
    b2 = _banded_conv_weights(params["w2"], w)

    one = jnp.ones((1, w * c0), jnp.float32)
    zero = jnp.zeros((1, w * c0), jnp.float32)

    # Stage 1: raw conv1 + per-tile BN partial statistics.
    y1, st1 = _conv_stage(x, b1, one, zero,
                          h=h, w=w, cin=c0, cout=c1, th=th, apply_pre=False)
    s1, o1 = _bn_scale_bias(st1, params["gamma1"], params["beta1"], count, w, c1)

    # Stage 2: BN1+ReLU fused into conv2's input read (no extra activation pass).
    y2, st2 = _conv_stage(y1, b2,
                          jnp.tile(s1, w)[None, :], jnp.tile(o1, w)[None, :],
                          h=h, w=w, cin=c1, cout=c2, th=th, apply_pre=True)
    s2, o2 = _bn_scale_bias(st2, params["gamma2"], params["beta2"], count, w, c2)

    # Final BN2 + ReLU (lane-dense elementwise kernel).
    out = _bn_relu_apply(y2, jnp.tile(s2, w)[None, :], jnp.tile(o2, w)[None, :],
                         h=h, th=th)

    out = out.reshape(n, h, w, c2)                 # free reshape (splits last dim)
    return jnp.transpose(out, (0, 3, 1, 2))        # back to NCHW (PyTorch convention)


def init_basic_block_params(key, inp, outp):
    """Deterministic parameter init matching the module's shapes."""
    k1, k2 = jax.random.split(key)

    def conv_weight(k, cin, cout):
        # PyTorch Conv2d weight is [cout, cin, 3, 3]; kernel-side layout is HWIO.
        fan_in = cin * 9
        bound = (1.0 / fan_in) ** 0.5
        w_oihw = jax.random.uniform(k, (cout, cin, 3, 3), jnp.float32,
                                    minval=-bound, maxval=bound)
        return jnp.transpose(w_oihw, (2, 3, 1, 0))  # -> [3, 3, cin, cout]

    return {
        "w1": conv_weight(k1, inp, outp),
        "gamma1": jnp.ones((outp,), jnp.float32),
        "beta1": jnp.zeros((outp,), jnp.float32),
        "w2": conv_weight(k2, outp, outp),
        "gamma2": jnp.ones((outp,), jnp.float32),
        "beta2": jnp.zeros((outp,), jnp.float32),
    }


def _reference_forward(x_nchw, params):
    """Pure-JAX reference mirroring the kernels' numerics (bf16 matmul, f32 stats)."""
    def conv(v, wgt):
        return jax.lax.conv_general_dilated(
            v.astype(jnp.bfloat16), wgt.astype(jnp.bfloat16),
            window_strides=(1, 1), padding="SAME",
            dimension_numbers=("NHWC", "HWIO", "NHWC"),
            preferred_element_type=jnp.float32)

    def bn_relu(v, gamma, beta):
        mean = v.mean(axis=(0, 1, 2))
        var = ((v - mean) ** 2).mean(axis=(0, 1, 2))
        return jnp.maximum((v - mean) * jax.lax.rsqrt(var + EPS) * gamma + beta, 0.0)

    x = jnp.transpose(x_nchw.astype(jnp.float32), (0, 2, 3, 1))
    y1 = conv(x, params["w1"])
    a1 = bn_relu(y1, params["gamma1"], params["beta1"])
    y2 = conv(a1, params["w2"])
    a2 = bn_relu(y2, params["gamma2"], params["beta2"])
    return jnp.transpose(a2, (0, 3, 1, 2))


if __name__ == "__main__":
    key = jax.random.PRNGKey(0)
    kx, kp = jax.random.split(key)

    inp, outp = 4, 8
    batch, height, width = 2, 16, 16
    x = jax.random.normal(kx, (batch, inp, height, width), dtype=jnp.float32)  # NCHW
    params = init_basic_block_params(kp, inp, outp)

    out = jax.block_until_ready(basic_block_forward(x, params))

    assert out.shape == (batch, outp, height, width), out.shape
    assert bool(jnp.all(out >= 0.0)), "ReLU output must be non-negative"

    ref = jax.block_until_ready(_reference_forward(x, params))
    max_err = float(jnp.max(jnp.abs(out - ref)))
    assert max_err < 1e-2, f"kernel/reference mismatch: max |diff| = {max_err}"

    print("KERNEL_OK")
</pallas_src>

<mosaic_0001>
module attributes {stable_mosaic.version = 11 : i64} {
  func.func @_conv_stage_kernel(%arg0: i32, %arg1: i32, %arg2: memref<1x8x64xf32, #tpu.memory_space<vmem>>, %arg3: memref<1x8x64xf32, #tpu.memory_space<vmem>>, %arg4: memref<1x8x64xf32, #tpu.memory_space<vmem>>, %arg5: memref<3x64x128xbf16, #tpu.memory_space<vmem>>, %arg6: memref<1x64xf32, #tpu.memory_space<vmem>>, %arg7: memref<1x64xf32, #tpu.memory_space<vmem>>, %arg8: memref<1x8x128xf32, #tpu.memory_space<vmem>>, %arg9: memref<1x2x128xf32, #tpu.memory_space<vmem>>, %arg10: memref<10x64xf32, #tpu.memory_space<vmem>>) attributes {dimension_semantics = [#tpu.dimension_semantics<parallel>, #tpu.dimension_semantics<parallel>], iteration_bounds = array<i64: 2, 2>, scalar_prefetch = 0 : i64, scratch_operands = 1 : i64, tpu.core_type = #tpu.core_type<tc>, window_params = [{transform_indices = @transform_0, window_bounds = array<i64: 1, 8, 64>}, {transform_indices = @transform_1, window_bounds = array<i64: 1, 8, 64>}, {transform_indices = @transform_2, window_bounds = array<i64: 1, 8, 64>}, {pipeline_mode = #tpu.pipeline_mode<synchronous>, transform_indices = @transform_3, window_bounds = array<i64: 3, 64, 128>}, {pipeline_mode = #tpu.pipeline_mode<synchronous>, transform_indices = @transform_4, window_bounds = array<i64: 1, 64>}, {pipeline_mode = #tpu.pipeline_mode<synchronous>, transform_indices = @transform_5, window_bounds = array<i64: 1, 64>}, {transform_indices = @transform_6, window_bounds = array<i64: 1, 8, 128>}, {transform_indices = @transform_7, window_bounds = array<i64: 1, 2, 128>}]} {
    %cst = arith.constant 0.000000e+00 : f32
    %0 = vector.broadcast %cst : f32 to vector<1x64xf32>
    %c0 = arith.constant 0 : index
    %c0_0 = arith.constant 0 : index
    %c0_1 = arith.constant 0 : index
    %1 = vector.load %arg2[%c0, %c0_0, %c0_1] : memref<1x8x64xf32, #tpu.memory_space<vmem>>, vector<1x8x64xf32>
    %2 = vector.shape_cast %1 : vector<1x8x64xf32> to vector<8x64xf32>
    %c1 = arith.constant 1 : index
    %c0_2 = arith.constant 0 : index
    %3 = vector.load %arg10[%c1, %c0_2] : memref<10x64xf32, #tpu.memory_space<vmem>>, vector<8x64xf32>
    tpu.vector_store %arg10[%c1, %c0_2], %2 {strides = array<i32>} : memref<10x64xf32, #tpu.memory_space<vmem>>, vector<8x64xf32>,
    %c0_i32 = arith.constant 0 : i32
    %4 = arith.cmpi eq, %arg1, %c0_i32 : i32
    %c0_3 = arith.constant 0 : index
    %c7 = arith.constant 7 : index
    %c0_4 = arith.constant 0 : index
    %5 = vector.load %arg3[%c0_3, %c7, %c0_4] : memref<1x8x64xf32, #tpu.memory_space<vmem>>, vector<1x1x64xf32>
    %6 = vector.shape_cast %5 : vector<1x1x64xf32> to vector<1x64xf32>
    %7 = arith.select %4, %0, %6 : vector<1x64xf32>
    %c0_5 = arith.constant 0 : index
    %c0_6 = arith.constant 0 : index
    %8 = vector.load %arg10[%c0_5, %c0_6] : memref<10x64xf32, #tpu.memory_space<vmem>>, vector<1x64xf32>
    tpu.vector_store %arg10[%c0_5, %c0_6], %7 {strides = array<i32>} : memref<10x64xf32, #tpu.memory_space<vmem>>, vector<1x64xf32>,
    %c1_i32 = arith.constant 1 : i32
    %9 = arith.cmpi eq, %arg1, %c1_i32 : i32
    %c0_7 = arith.constant 0 : index
    %c0_8 = arith.constant 0 : index
    %c0_9 = arith.constant 0 : index
    %10 = vector.load %arg4[%c0_7, %c0_8, %c0_9] : memref<1x8x64xf32, #tpu.memory_space<vmem>>, vector<1x1x64xf32>
    %11 = vector.shape_cast %10 : vector<1x1x64xf32> to vector<1x64xf32>
    %12 = arith.select %9, %0, %11 : vector<1x64xf32>
    %c9 = arith.constant 9 : index
    %c0_10 = arith.constant 0 : index
    %13 = vector.load %arg10[%c9, %c0_10] : memref<10x64xf32, #tpu.memory_space<vmem>>, vector<1x64xf32>
    tpu.vector_store %arg10[%c9, %c0_10], %12 {strides = array<i32>} : memref<10x64xf32, #tpu.memory_space<vmem>>, vector<1x64xf32>,
    %c0_11 = arith.constant 0 : index
    %c0_12 = arith.constant 0 : index
    %14 = vector.load %arg10[%c0_11, %c0_12] : memref<10x64xf32, #tpu.memory_space<vmem>>, vector<10x64xf32>
    %15 = arith.truncf %14 : vector<10x64xf32> to vector<10x64xbf16>
    %cst_13 = arith.constant 0.000000e+00 : f32
    %16 = vector.broadcast %cst_13 : f32 to vector<8x128xf32>
    %17 = vector.extract_strided_slice %15 {offsets = [0, 0], sizes = [8, 64], strides = [1, 1]} : vector<10x64xbf16> to vector<8x64xbf16>
    %c0_14 = arith.constant 0 : index
    %c0_15 = arith.constant 0 : index
    %c0_16 = arith.constant 0 : index
    %18 = vector.load %arg5[%c0_14, %c0_15, %c0_16] : memref<3x64x128xbf16, #tpu.memory_space<vmem>>, vector<1x64x128xbf16>
    %19 = vector.shape_cast %18 : vector<1x64x128xbf16> to vector<64x128xbf16>
    %cst_17 = arith.constant dense<0.000000e+00> : vector<8x128xf32>
    %20 = tpu.matmul %17, %19, %cst_17 {dimension_numbers = #tpu.dot_dimension_numbers<[1], [0], [0], [1], [0, 0, 1, 1], [], []>} : vector<8x64xbf16>, vector<64x128xbf16>, vector<8x128xf32> -> vector<8x128xf32>
    %21 = arith.addf %16, %20 : vector<8x128xf32>
    %22 = vector.extract_strided_slice %15 {offsets = [1, 0], sizes = [8, 64], strides = [1, 1]} : vector<10x64xbf16> to vector<8x64xbf16>
    %c1_18 = arith.constant 1 : index
    %c0_19 = arith.constant 0 : index
    %c0_20 = arith.constant 0 : index
    %23 = vector.load %arg5[%c1_18, %c0_19, %c0_20] : memref<3x64x128xbf16, #tpu.memory_space<vmem>>, vector<1x64x128xbf16>
    %24 = vector.shape_cast %23 : vector<1x64x128xbf16> to vector<64x128xbf16>
    %cst_21 = arith.constant dense<0.000000e+00> : vector<8x128xf32>
    %25 = tpu.matmul %22, %24, %cst_21 {dimension_numbers = #tpu.dot_dimension_numbers<[1], [0], [0], [1], [0, 0, 1, 1], [], []>} : vector<8x64xbf16>, vector<64x128xbf16>, vector<8x128xf32> -> vector<8x128xf32>
    %26 = arith.addf %21, %25 : vector<8x128xf32>
    %27 = vector.extract_strided_slice %15 {offsets = [2, 0], sizes = [8, 64], strides = [1, 1]} : vector<10x64xbf16> to vector<8x64xbf16>
    %c2 = arith.constant 2 : index
    %c0_22 = arith.constant 0 : index
    %c0_23 = arith.constant 0 : index
    %28 = vector.load %arg5[%c2, %c0_22, %c0_23] : memref<3x64x128xbf16, #tpu.memory_space<vmem>>, vector<1x64x128xbf16>
    %29 = vector.shape_cast %28 : vector<1x64x128xbf16> to vector<64x128xbf16>
    %cst_24 = arith.constant dense<0.000000e+00> : vector<8x128xf32>
    %30 = tpu.matmul %27, %29, %cst_24 {dimension_numbers = #tpu.dot_dimension_numbers<[1], [0], [0], [1], [0, 0, 1, 1], [], []>} : vector<8x64xbf16>, vector<64x128xbf16>, vector<8x128xf32> -> vector<8x128xf32>
    %31 = arith.addf %26, %30 : vector<8x128xf32>
    %cst_25 = arith.constant dense<0.000000e+00> : vector<128xf32>
    %32 = vector.multi_reduction <add>, %31, %cst_25 [0] : vector<8x128xf32> to vector<128xf32>
    %33 = vector.shape_cast %32 : vector<128xf32> to vector<1x128xf32>
    %c0_26 = arith.constant 0 : index
    %c0_27 = arith.constant 0 : index
    %c0_28 = arith.constant 0 : index
    %34 = vector.load %arg9[%c0_26, %c0_27, %c0_28] : memref<1x2x128xf32, #tpu.memory_space<vmem>>, vector<1x1x128xf32>
    %35 = vector.shape_cast %34 : vector<1x1x128xf32> to vector<1x128xf32>
    %36 = vector.shape_cast %33 : vector<1x128xf32> to vector<1x1x128xf32>
    tpu.vector_store %arg9[%c0_26, %c0_27, %c0_28], %36 {strides = array<i32>} : memref<1x2x128xf32, #tpu.memory_space<vmem>>, vector<1x1x128xf32>,
    %37 = arith.mulf %31, %31 : vector<8x128xf32>
    %cst_29 = arith.constant dense<0.000000e+00> : vector<128xf32>
    %38 = vector.multi_reduction <add>, %37, %cst_29 [0] : vector<8x128xf32> to vector<128xf32>
    %39 = vector.shape_cast %38 : vector<128xf32> to vector<1x128xf32>
    %c0_30 = arith.constant 0 : index
    %c1_31 = arith.constant 1 : index
    %c0_32 = arith.constant 0 : index
    %40 = vector.load %arg9[%c0_30, %c1_31, %c0_32] : memref<1x2x128xf32, #tpu.memory_space<vmem>>, vector<1x1x128xf32>
    %41 = vector.shape_cast %40 : vector<1x1x128xf32> to vector<1x128xf32>
    %42 = vector.shape_cast %39 : vector<1x128xf32> to vector<1x1x128xf32>
    tpu.vector_store %arg9[%c0_30, %c1_31, %c0_32], %42 {strides = array<i32>} : memref<1x2x128xf32, #tpu.memory_space<vmem>>, vector<1x1x128xf32>,
    %c0_33 = arith.constant 0 : index
    %c0_34 = arith.constant 0 : index
    %c0_35 = arith.constant 0 : index
    %43 = vector.load %arg8[%c0_33, %c0_34, %c0_35] : memref<1x8x128xf32, #tpu.memory_space<vmem>>, vector<1x8x128xf32>
    %44 = vector.shape_cast %43 : vector<1x8x128xf32> to vector<8x128xf32>
    %45 = vector.shape_cast %31 : vector<8x128xf32> to vector<1x8x128xf32>
    tpu.vector_store %arg8[%c0_33, %c0_34, %c0_35], %45 {strides = array<i32>} : memref<1x8x128xf32, #tpu.memory_space<vmem>>, vector<1x8x128xf32>,
    return
  }
  func.func @transform_0(%arg0: i32, %arg1: i32) -> (i32, i32, i32) {
    %c0_i32 = arith.constant 0 : i32
    %c0_i32_0 = arith.constant 0 : i32
    return %arg0, %arg1, %c0_i32 : i32, i32, i32
  }
  func.func @transform_1(%arg0: i32, %arg1: i32) -> (i32, i32, i32) {
    %c1_i32 = arith.constant 1 : i32
    %0 = arith.muli %arg1, %c1_i32 : i32
    %c1_i32_0 = arith.constant 1 : i32
    %1 = arith.subi %0, %c1_i32_0 : i32
    %c0_i32 = arith.constant 0 : i32
    %2 = arith.maxsi %1, %c0_i32 : i32
    %c0_i32_1 = arith.constant 0 : i32
    %c0_i32_2 = arith.constant 0 : i32
    return %arg0, %2, %c0_i32_1 : i32, i32, i32
  }
  func.func @transform_2(%arg0: i32, %arg1: i32) -> (i32, i32, i32) {
    %c1_i32 = arith.constant 1 : i32
    %0 = arith.muli %arg1, %c1_i32 : i32
    %c1_i32_0 = arith.constant 1 : i32
    %1 = arith.addi %0, %c1_i32_0 : i32
    %c1_i32_1 = arith.constant 1 : i32
    %2 = arith.minsi %1, %c1_i32_1 : i32
    %c0_i32 = arith.constant 0 : i32
    %c0_i32_2 = arith.constant 0 : i32
    return %arg0, %2, %c0_i32 : i32, i32, i32
  }
  func.func @transform_3(%arg0: i32, %arg1: i32) -> (i32, i32, i32) {
    %c0_i32 = arith.constant 0 : i32
    %c0_i32_0 = arith.constant 0 : i32
    %c0_i32_1 = arith.constant 0 : i32
    %c0_i32_2 = arith.constant 0 : i32
    return %c0_i32, %c0_i32_0, %c0_i32_1 : i32, i32, i32
  }
  func.func @transform_4(%arg0: i32, %arg1: i32) -> (i32, i32) {
    %c0_i32 = arith.constant 0 : i32
    %c0_i32_0 = arith.constant 0 : i32
    %c0_i32_1 = arith.constant 0 : i32
    return %c0_i32, %c0_i32_0 : i32, i32
  }
  func.func @transform_5(%arg0: i32, %arg1: i32) -> (i32, i32) {
    %c0_i32 = arith.constant 0 : i32
    %c0_i32_0 = arith.constant 0 : i32
    %c0_i32_1 = arith.constant 0 : i32
    return %c0_i32, %c0_i32_0 : i32, i32
  }
  func.func @transform_6(%arg0: i32, %arg1: i32) -> (i32, i32, i32) {
    %c0_i32 = arith.constant 0 : i32
    %c0_i32_0 = arith.constant 0 : i32
    return %arg0, %arg1, %c0_i32 : i32, i32, i32
  }
  func.func @transform_7(%arg0: i32, %arg1: i32) -> (i32, i32, i32) {
    %c2_i32 = arith.constant 2 : i32
    %0 = arith.muli %arg0, %c2_i32 : i32
    %1 = arith.addi %0, %arg1 : i32
    %c0_i32 = arith.constant 0 : i32
    %c0_i32_0 = arith.constant 0 : i32
    %c0_i32_1 = arith.constant 0 : i32
    return %1, %c0_i32, %c0_i32_0 : i32, i32, i32
  }
}

module attributes {stable_mosaic.version = 11 : i64} {
  func.func @_conv_stage_kernel(%arg0: i32, %arg1: i32, %arg2: memref<1x8x128xf32, #tpu.memory_space<vmem>>, %arg3: memref<1x8x128xf32, #tpu.memory_space<vmem>>, %arg4: memref<1x8x128xf32, #tpu.memory_space<vmem>>, %arg5: memref<3x128x128xbf16, #tpu.memory_space<vmem>>, %arg6: memref<1x128xf32, #tpu.memory_space<vmem>>, %arg7: memref<1x128xf32, #tpu.memory_space<vmem>>, %arg8: memref<1x8x128xf32, #tpu.memory_space<vmem>>, %arg9: memref<1x2x128xf32, #tpu.memory_space<vmem>>, %arg10: memref<10x128xf32, #tpu.memory_space<vmem>>) attributes {dimension_semantics = [#tpu.dimension_semantics<parallel>, #tpu.dimension_semantics<parallel>], iteration_bounds = array<i64: 2, 2>, scalar_prefetch = 0 : i64, scratch_operands = 1 : i64, tpu.core_type = #tpu.core_type<tc>, window_params = [{transform_indices = @transform_0, window_bounds = array<i64: 1, 8, 128>}, {transform_indices = @transform_1, window_bounds = array<i64: 1, 8, 128>}, {transform_indices = @transform_2, window_bounds = array<i64: 1, 8, 128>}, {pipeline_mode = #tpu.pipeline_mode<synchronous>, transform_indices = @transform_3, window_bounds = array<i64: 3, 128, 128>}, {pipeline_mode = #tpu.pipeline_mode<synchronous>, transform_indices = @transform_4, window_bounds = array<i64: 1, 128>}, {pipeline_mode = #tpu.pipeline_mode<synchronous>, transform_indices = @transform_5, window_bounds = array<i64: 1, 128>}, {transform_indices = @transform_6, window_bounds = array<i64: 1, 8, 128>}, {transform_indices = @transform_7, window_bounds = array<i64: 1, 2, 128>}]} {
    %cst = arith.constant 0.000000e+00 : f32
    %0 = vector.broadcast %cst : f32 to vector<1x128xf32>
    %c0 = arith.constant 0 : index
    %c0_0 = arith.constant 0 : index
    %c0_1 = arith.constant 0 : index
    %1 = vector.load %arg2[%c0, %c0_0, %c0_1] : memref<1x8x128xf32, #tpu.memory_space<vmem>>, vector<1x8x128xf32>
    %2 = vector.shape_cast %1 : vector<1x8x128xf32> to vector<8x128xf32>
    %c0_2 = arith.constant 0 : index
    %c0_3 = arith.constant 0 : index
    %3 = vector.load %arg6[%c0_2, %c0_3] : memref<1x128xf32, #tpu.memory_space<vmem>>, vector<1x128xf32>
    %4 = vector.broadcast %3 : vector<1x128xf32> to vector<8x128xf32>
    %5 = arith.mulf %2, %4 : vector<8x128xf32>
    %c0_4 = arith.constant 0 : index
    %c0_5 = arith.constant 0 : index
    %6 = vector.load %arg7[%c0_4, %c0_5] : memref<1x128xf32, #tpu.memory_space<vmem>>, vector<1x128xf32>
    %7 = vector.broadcast %6 : vector<1x128xf32> to vector<8x128xf32>
    %8 = arith.addf %5, %7 : vector<8x128xf32>
    %cst_6 = arith.constant 0.000000e+00 : f32
    %9 = vector.broadcast %cst_6 : f32 to vector<8x128xf32>
    %10 = arith.maximumf %8, %9 : vector<8x128xf32>
    %c1 = arith.constant 1 : index
    %c0_7 = arith.constant 0 : index
    %11 = vector.load %arg10[%c1, %c0_7] : memref<10x128xf32, #tpu.memory_space<vmem>>, vector<8x128xf32>
    tpu.vector_store %arg10[%c1, %c0_7], %10 {strides = array<i32>} : memref<10x128xf32, #tpu.memory_space<vmem>>, vector<8x128xf32>,
    %c0_i32 = arith.constant 0 : i32
    %12 = arith.cmpi eq, %arg1, %c0_i32 : i32
    %c0_8 = arith.constant 0 : index
    %c7 = arith.constant 7 : index
    %c0_9 = arith.constant 0 : index
    %13 = vector.load %arg3[%c0_8, %c7, %c0_9] : memref<1x8x128xf32, #tpu.memory_space<vmem>>, vector<1x1x128xf32>
    %14 = vector.shape_cast %13 : vector<1x1x128xf32> to vector<1x128xf32>
    %c0_10 = arith.constant 0 : index
    %c0_11 = arith.constant 0 : index
    %15 = vector.load %arg6[%c0_10, %c0_11] : memref<1x128xf32, #tpu.memory_space<vmem>>, vector<1x128xf32>
    %16 = arith.mulf %14, %15 : vector<1x128xf32>
    %c0_12 = arith.constant 0 : index
    %c0_13 = arith.constant 0 : index
    %17 = vector.load %arg7[%c0_12, %c0_13] : memref<1x128xf32, #tpu.memory_space<vmem>>, vector<1x128xf32>
    %18 = arith.addf %16, %17 : vector<1x128xf32>
    %cst_14 = arith.constant 0.000000e+00 : f32
    %19 = vector.broadcast %cst_14 : f32 to vector<1x128xf32>
    %20 = arith.maximumf %18, %19 : vector<1x128xf32>
    %21 = arith.select %12, %0, %20 : vector<1x128xf32>
    %c0_15 = arith.constant 0 : index
    %c0_16 = arith.constant 0 : index
    %22 = vector.load %arg10[%c0_15, %c0_16] : memref<10x128xf32, #tpu.memory_space<vmem>>, vector<1x128xf32>
    tpu.vector_store %arg10[%c0_15, %c0_16], %21 {strides = array<i32>} : memref<10x128xf32, #tpu.memory_space<vmem>>, vector<1x128xf32>,
    %c1_i32 = arith.constant 1 : i32
    %23 = arith.cmpi eq, %arg1, %c1_i32 : i32
    %c0_17 = arith.constant 0 : index
    %c0_18 = arith.constant 0 : index
    %c0_19 = arith.constant 0 : index
    %24 = vector.load %arg4[%c0_17, %c0_18, %c0_19] : memref<1x8x128xf32, #tpu.memory_space<vmem>>, vector<1x1x128xf32>
    %25 = vector.shape_cast %24 : vector<1x1x128xf32> to vector<1x128xf32>
    %c0_20 = arith.constant 0 : index
    %c0_21 = arith.constant 0 : index
    %26 = vector.load %arg6[%c0_20, %c0_21] : memref<1x128xf32, #tpu.memory_space<vmem>>, vector<1x128xf32>
    %27 = arith.mulf %25, %26 : vector<1x128xf32>
    %c0_22 = arith.constant 0 : index
    %c0_23 = arith.constant 0 : index
    %28 = vector.load %arg7[%c0_22, %c0_23] : memref<1x128xf32, #tpu.memory_space<vmem>>, vector<1x128xf32>
    %29 = arith.addf %27, %28 : vector<1x128xf32>
    %cst_24 = arith.constant 0.000000e+00 : f32
    %30 = vector.broadcast %cst_24 : f32 to vector<1x128xf32>
    %31 = arith.maximumf %29, %30 : vector<1x128xf32>
    %32 = arith.select %23, %0, %31 : vector<1x128xf32>
    %c9 = arith.constant 9 : index
    %c0_25 = arith.constant 0 : index
    %33 = vector.load %arg10[%c9, %c0_25] : memref<10x128xf32, #tpu.memory_space<vmem>>, vector<1x128xf32>
    tpu.vector_store %arg10[%c9, %c0_25], %32 {strides = array<i32>} : memref<10x128xf32, #tpu.memory_space<vmem>>, vector<1x128xf32>,
    %c0_26 = arith.constant 0 : index
    %c0_27 = arith.constant 0 : index
    %34 = vector.load %arg10[%c0_26, %c0_27] : memref<10x128xf32, #tpu.memory_space<vmem>>, vector<10x128xf32>
    %35 = arith.truncf %34 : vector<10x128xf32> to vector<10x128xbf16>
    %cst_28 = arith.constant 0.000000e+00 : f32
    %36 = vector.broadcast %cst_28 : f32 to vector<8x128xf32>
    %37 = vector.extract_strided_slice %35 {offsets = [0, 0], sizes = [8, 128], strides = [1, 1]} : vector<10x128xbf16> to vector<8x128xbf16>
    %c0_29 = arith.constant 0 : index
    %c0_30 = arith.constant 0 : index
    %c0_31 = arith.constant 0 : index
    %38 = vector.load %arg5[%c0_29, %c0_30, %c0_31] : memref<3x128x128xbf16, #tpu.memory_space<vmem>>, vector<1x128x128xbf16>
    %39 = vector.shape_cast %38 : vector<1x128x128xbf16> to vector<128x128xbf16>
    %cst_32 = arith.constant dense<0.000000e+00> : vector<8x128xf32>
    %40 = tpu.matmul %37, %39, %cst_32 {dimension_numbers = #tpu.dot_dimension_numbers<[1], [0], [0], [1], [0, 0, 1, 1], [], []>} : vector<8x128xbf16>, vector<128x128xbf16>, vector<8x128xf32> -> vector<8x128xf32>
    %41 = arith.addf %36, %40 : vector<8x128xf32>
    %42 = vector.extract_strided_slice %35 {offsets = [1, 0], sizes = [8, 128], strides = [1, 1]} : vector<10x128xbf16> to vector<8x128xbf16>
    %c1_33 = arith.constant 1 : index
    %c0_34 = arith.constant 0 : index
    %c0_35 = arith.constant 0 : index
    %43 = vector.load %arg5[%c1_33, %c0_34, %c0_35] : memref<3x128x128xbf16, #tpu.memory_space<vmem>>, vector<1x128x128xbf16>
    %44 = vector.shape_cast %43 : vector<1x128x128xbf16> to vector<128x128xbf16>
    %cst_36 = arith.constant dense<0.000000e+00> : vector<8x128xf32>
    %45 = tpu.matmul %42, %44, %cst_36 {dimension_numbers = #tpu.dot_dimension_numbers<[1], [0], [0], [1], [0, 0, 1, 1], [], []>} : vector<8x128xbf16>, vector<128x128xbf16>, vector<8x128xf32> -> vector<8x128xf32>
    %46 = arith.addf %41, %45 : vector<8x128xf32>
    %47 = vector.extract_strided_slice %35 {offsets = [2, 0], sizes = [8, 128], strides = [1, 1]} : vector<10x128xbf16> to vector<8x128xbf16>
    %c2 = arith.constant 2 : index
    %c0_37 = arith.constant 0 : index
    %c0_38 = arith.constant 0 : index
    %48 = vector.load %arg5[%c2, %c0_37, %c0_38] : memref<3x128x128xbf16, #tpu.memory_space<vmem>>, vector<1x128x128xbf16>
    %49 = vector.shape_cast %48 : vector<1x128x128xbf16> to vector<128x128xbf16>
    %cst_39 = arith.constant dense<0.000000e+00> : vector<8x128xf32>
    %50 = tpu.matmul %47, %49, %cst_39 {dimension_numbers = #tpu.dot_dimension_numbers<[1], [0], [0], [1], [0, 0, 1, 1], [], []>} : vector<8x128xbf16>, vector<128x128xbf16>, vector<8x128xf32> -> vector<8x128xf32>
    %51 = arith.addf %46, %50 : vector<8x128xf32>
    %cst_40 = arith.constant dense<0.000000e+00> : vector<128xf32>
    %52 = vector.multi_reduction <add>, %51, %cst_40 [0] : vector<8x128xf32> to vector<128xf32>
    %53 = vector.shape_cast %52 : vector<128xf32> to vector<1x128xf32>
    %c0_41 = arith.constant 0 : index
    %c0_42 = arith.constant 0 : index
    %c0_43 = arith.constant 0 : index
    %54 = vector.load %arg9[%c0_41, %c0_42, %c0_43] : memref<1x2x128xf32, #tpu.memory_space<vmem>>, vector<1x1x128xf32>
    %55 = vector.shape_cast %54 : vector<1x1x128xf32> to vector<1x128xf32>
    %56 = vector.shape_cast %53 : vector<1x128xf32> to vector<1x1x128xf32>
    tpu.vector_store %arg9[%c0_41, %c0_42, %c0_43], %56 {strides = array<i32>} : memref<1x2x128xf32, #tpu.memory_space<vmem>>, vector<1x1x128xf32>,
    %57 = arith.mulf %51, %51 : vector<8x128xf32>
    %cst_44 = arith.constant dense<0.000000e+00> : vector<128xf32>
    %58 = vector.multi_reduction <add>, %57, %cst_44 [0] : vector<8x128xf32> to vector<128xf32>
    %59 = vector.shape_cast %58 : vector<128xf32> to vector<1x128xf32>
    %c0_45 = arith.constant 0 : index
    %c1_46 = arith.constant 1 : index
    %c0_47 = arith.constant 0 : index
    %60 = vector.load %arg9[%c0_45, %c1_46, %c0_47] : memref<1x2x128xf32, #tpu.memory_space<vmem>>, vector<1x1x128xf32>
    %61 = vector.shape_cast %60 : vector<1x1x128xf32> to vector<1x128xf32>
    %62 = vector.shape_cast %59 : vector<1x128xf32> to vector<1x1x128xf32>
    tpu.vector_store %arg9[%c0_45, %c1_46, %c0_47], %62 {strides = array<i32>} : memref<1x2x128xf32, #tpu.memory_space<vmem>>, vector<1x1x128xf32>,
    %c0_48 = arith.constant 0 : index
    %c0_49 = arith.constant 0 : index
    %c0_50 = arith.constant 0 : index
    %63 = vector.load %arg8[%c0_48, %c0_49, %c0_50] : memref<1x8x128xf32, #tpu.memory_space<vmem>>, vector<1x8x128xf32>
    %64 = vector.shape_cast %63 : vector<1x8x128xf32> to vector<8x128xf32>
    %65 = vector.shape_cast %51 : vector<8x128xf32> to vector<1x8x128xf32>
    tpu.vector_store %arg8[%c0_48, %c0_49, %c0_50], %65 {strides = array<i32>} : memref<1x8x128xf32, #tpu.memory_space<vmem>>, vector<1x8x128xf32>,
    return
  }
  func.func @transform_0(%arg0: i32, %arg1: i32) -> (i32, i32, i32) {
    %c0_i32 = arith.constant 0 : i32
    %c0_i32_0 = arith.constant 0 : i32
    return %arg0, %arg1, %c0_i32 : i32, i32, i32
  }
  func.func @transform_1(%arg0: i32, %arg1: i32) -> (i32, i32, i32) {
    %c1_i32 = arith.constant 1 : i32
    %0 = arith.muli %arg1, %c1_i32 : i32
    %c1_i32_0 = arith.constant 1 : i32
    %1 = arith.subi %0, %c1_i32_0 : i32
    %c0_i32 = arith.constant 0 : i32
    %2 = arith.maxsi %1, %c0_i32 : i32
    %c0_i32_1 = arith.constant 0 : i32
    %c0_i32_2 = arith.constant 0 : i32
    return %arg0, %2, %c0_i32_1 : i32, i32, i32
  }
  func.func @transform_2(%arg0: i32, %arg1: i32) -> (i32, i32, i32) {
    %c1_i32 = arith.constant 1 : i32
    %0 = arith.muli %arg1, %c1_i32 : i32
    %c1_i32_0 = arith.constant 1 : i32
    %1 = arith.addi %0, %c1_i32_0 : i32
    %c1_i32_1 = arith.constant 1 : i32
    %2 = arith.minsi %1, %c1_i32_1 : i32
    %c0_i32 = arith.constant 0 : i32
    %c0_i32_2 = arith.constant 0 : i32
    return %arg0, %2, %c0_i32 : i32, i32, i32
  }
  func.func @transform_3(%arg0: i32, %arg1: i32) -> (i32, i32, i32) {
    %c0_i32 = arith.constant 0 : i32
    %c0_i32_0 = arith.constant 0 : i32
    %c0_i32_1 = arith.constant 0 : i32
    %c0_i32_2 = arith.constant 0 : i32
    return %c0_i32, %c0_i32_0, %c0_i32_1 : i32, i32, i32
  }
  func.func @transform_4(%arg0: i32, %arg1: i32) -> (i32, i32) {
    %c0_i32 = arith.constant 0 : i32
    %c0_i32_0 = arith.constant 0 : i32
    %c0_i32_1 = arith.constant 0 : i32
    return %c0_i32, %c0_i32_0 : i32, i32
  }
  func.func @transform_5(%arg0: i32, %arg1: i32) -> (i32, i32) {
    %c0_i32 = arith.constant 0 : i32
    %c0_i32_0 = arith.constant 0 : i32
    %c0_i32_1 = arith.constant 0 : i32
    return %c0_i32, %c0_i32_0 : i32, i32
  }
  func.func @transform_6(%arg0: i32, %arg1: i32) -> (i32, i32, i32) {
    %c0_i32 = arith.constant 0 : i32
    %c0_i32_0 = arith.constant 0 : i32
    return %arg0, %arg1, %c0_i32 : i32, i32, i32
  }
  func.func @transform_7(%arg0: i32, %arg1: i32) -> (i32, i32, i32) {
    %c2_i32 = arith.constant 2 : i32
    %0 = arith.muli %arg0, %c2_i32 : i32
    %1 = arith.addi %0, %arg1 : i32
    %c0_i32 = arith.constant 0 : i32
    %c0_i32_0 = arith.constant 0 : i32
    %c0_i32_1 = arith.constant 0 : i32
    return %1, %c0_i32, %c0_i32_0 : i32, i32, i32
  }
}

module attributes {stable_mosaic.version = 11 : i64} {
  func.func @_bn_relu_kernel(%arg0: i32, %arg1: i32, %arg2: memref<1x8x128xf32, #tpu.memory_space<vmem>>, %arg3: memref<1x128xf32, #tpu.memory_space<vmem>>, %arg4: memref<1x128xf32, #tpu.memory_space<vmem>>, %arg5: memref<1x8x128xf32, #tpu.memory_space<vmem>>) attributes {dimension_semantics = [#tpu.dimension_semantics<parallel>, #tpu.dimension_semantics<parallel>], iteration_bounds = array<i64: 2, 2>, scalar_prefetch = 0 : i64, scratch_operands = 0 : i64, tpu.core_type = #tpu.core_type<tc>, window_params = [{transform_indices = @transform_0, window_bounds = array<i64: 1, 8, 128>}, {pipeline_mode = #tpu.pipeline_mode<synchronous>, transform_indices = @transform_1, window_bounds = array<i64: 1, 128>}, {pipeline_mode = #tpu.pipeline_mode<synchronous>, transform_indices = @transform_2, window_bounds = array<i64: 1, 128>}, {transform_indices = @transform_3, window_bounds = array<i64: 1, 8, 128>}]} {
    %c0 = arith.constant 0 : index
    %c0_0 = arith.constant 0 : index
    %c0_1 = arith.constant 0 : index
    %0 = vector.load %arg2[%c0, %c0_0, %c0_1] : memref<1x8x128xf32, #tpu.memory_space<vmem>>, vector<1x8x128xf32>
    %1 = vector.shape_cast %0 : vector<1x8x128xf32> to vector<8x128xf32>
    %c0_2 = arith.constant 0 : index
    %c0_3 = arith.constant 0 : index
    %2 = vector.load %arg3[%c0_2, %c0_3] : memref<1x128xf32, #tpu.memory_space<vmem>>, vector<1x128xf32>
    %3 = vector.broadcast %2 : vector<1x128xf32> to vector<8x128xf32>
    %4 = arith.mulf %1, %3 : vector<8x128xf32>
    %c0_4 = arith.constant 0 : index
    %c0_5 = arith.constant 0 : index
    %5 = vector.load %arg4[%c0_4, %c0_5] : memref<1x128xf32, #tpu.memory_space<vmem>>, vector<1x128xf32>
    %6 = vector.broadcast %5 : vector<1x128xf32> to vector<8x128xf32>
    %7 = arith.addf %4, %6 : vector<8x128xf32>
    %cst = arith.constant 0.000000e+00 : f32
    %8 = vector.broadcast %cst : f32 to vector<8x128xf32>
    %9 = arith.maximumf %7, %8 : vector<8x128xf32>
    %c0_6 = arith.constant 0 : index
    %c0_7 = arith.constant 0 : index
    %c0_8 = arith.constant 0 : index
    %10 = vector.load %arg5[%c0_6, %c0_7, %c0_8] : memref<1x8x128xf32, #tpu.memory_space<vmem>>, vector<1x8x128xf32>
    %11 = vector.shape_cast %10 : vector<1x8x128xf32> to vector<8x128xf32>
    %12 = vector.shape_cast %9 : vector<8x128xf32> to vector<1x8x128xf32>
    tpu.vector_store %arg5[%c0_6, %c0_7, %c0_8], %12 {strides = array<i32>} : memref<1x8x128xf32, #tpu.memory_space<vmem>>, vector<1x8x128xf32>,
    return
  }
  func.func @transform_0(%arg0: i32, %arg1: i32) -> (i32, i32, i32) {
    %c0_i32 = arith.constant 0 : i32
    %c0_i32_0 = arith.constant 0 : i32
    return %arg0, %arg1, %c0_i32 : i32, i32, i32
  }
  func.func @transform_1(%arg0: i32, %arg1: i32) -> (i32, i32) {
    %c0_i32 = arith.constant 0 : i32
    %c0_i32_0 = arith.constant 0 : i32
    %c0_i32_1 = arith.constant 0 : i32
    return %c0_i32, %c0_i32_0 : i32, i32
  }
  func.func @transform_2(%arg0: i32, %arg1: i32) -> (i32, i32) {
    %c0_i32 = arith.constant 0 : i32
    %c0_i32_0 = arith.constant 0 : i32
    %c0_i32_1 = arith.constant 0 : i32
    return %c0_i32, %c0_i32_0 : i32, i32
  }
  func.func @transform_3(%arg0: i32, %arg1: i32) -> (i32, i32, i32) {
    %c0_i32 = arith.constant 0 : i32
    %c0_i32_0 = arith.constant 0 : i32
    return %arg0, %arg1, %c0_i32 : i32, i32, i32
  }
}

</mosaic_0001>

<llo_original>
// kernel: basic_block_forward.3
$region0: #{basic_block_forward.3}
  #allocation0 [shape = 'u32[]', space=smem, size = 0x4, offset = 0x4, fixed_abs, tag = 'smem constant byte address 0x4 - core index']
  #allocation1 [shape = 'u32[144,128]{1,0:T(1,128)}', space=vmem, size = 0x12000, scoped, tag = 'internal scratch']
  #allocation2 [shape = 'f32[10,64]{1,0:T(8,128)}', space=vmem, size = 0x2000, scoped, tag = 'scratch operand']
  %s0 = inlined_call_operand.vmem [shape: f32[2,16,64], index: 0, kind: input, shape index: {}, may-alias: {0,1,2}]
  %s1 = inlined_call_operand.vmem [shape: f32[2,16,64], index: 1, kind: input, shape index: {}, may-alias: {0,1,2}]
  %s2 = inlined_call_operand.vmem [shape: f32[2,16,64], index: 2, kind: input, shape index: {}, may-alias: {0,1,2}]
  %s3 = inlined_call_operand.vmem [shape: bf16[3,64,128], index: 3, kind: input, shape index: {}]
  %s4 = inlined_call_operand.vmem [shape: f32[1,64], index: 4, kind: input, shape index: {}]
  %s5 = inlined_call_operand.vmem [shape: f32[1,64], index: 5, kind: input, shape index: {}]
  %s6 = inlined_call_operand.vmem [shape: f32[2,16,128], index: 6, kind: output, shape index: {0}]
  %s7 = inlined_call_operand.vmem [shape: f32[4,2,128], index: 7, kind: output, shape index: {1}]
  %8 = xla_tuple %s6, %s7
  %s9 = sld [smem:[#allocation0]]
  $region65: #{basic_block_forward.3} parent=0
    _
  %s11 = ssub.s32 1, %s9
  %s12 = scalar_select 0, %s11, %s9
  loop: start=0, step=1, limit=6
  $region2: #{basic_block_forward.3} parent=0 // loop_pre_header
    _
  $region3: #{basic_block_forward.3} parent=0 // loop_header
    %s14 = sphi 0, %s18
    %p15 = scmp.ge.s32.totalorder %s14, 6
    %s21 = sphi 0, %s33
    %s22 = sphi 0, %s29
    %s23 = sphi 0, %s21
    %s24 = sphi 0, %s22
    %s25 = sphi 0, %s23
    %s26 = sphi 0, %s24
    %s38 = sphi 0, %s40
    %s41 = sphi 0, %s38
    %s42 = sphi 0, %s41
    %s58 = sphi 0, %s42
    %s72 = sphi 0, %s74
    %s75 = sphi 0, %s72
    %s76 = sphi 0, %s75
    %s92 = sphi 0, %s76
    %s106 = sphi 0, %s108
    %s109 = sphi 0, %s106
    %s110 = sphi 0, %s109
    %s126 = sphi 0, %s110
    %s130 = sphi 0, %s130
    %s132 = sphi 0, %s130
    %s133 = sphi 0, %s132
    %s147 = sphi 0, %s133
    %s151 = sphi 0, %s151
    %s153 = sphi 0, %s151
    %s154 = sphi 0, %s153
    %s168 = sphi 0, %s154
    %s172 = sphi 0, %s172
    %s174 = sphi 0, %s172
    %s175 = sphi 0, %s174
    %s189 = sphi 0, %s175
    %s197 = sphi 0, %s199
    %s200 = sphi 0, %s197
    %s201 = sphi 0, %s200
    %s217 = sphi 0, %s201
    %s227 = sphi 0, %s229
    %s230 = sphi 0, %s227
    %s231 = sphi 0, %s230
    %s247 = sphi 0, %s231
  $region4: #{basic_block_forward.3} parent=0 // loop_header_branch
    %17 = sbr.rel (%p15) target = $region8
  $region5: #{basic_block_forward.3} parent=0 // loop_body
    %s19 = ssub.s32 %s14, 1
    %s20 = ssub.s32 %s14, 2
    %s27 = sadd.s32 1, %s22
    %p28 = scmp.ge.s32.totalorder %s27, 2
    %s29 = scalar_select %p28, 0, %s27
    %s30 = sadd.s32 1, %s21
    %s31 = scalar_select %p28, %s30, %s21
    %p32 = scmp.ge.s32.totalorder %s31, 2
    %s33 = scalar_select %p32, 0, %s31
    %s34 = ssub.s32 %s21, %s33
    %s35 = ssub.s32 %s22, %s29
    %s36 = sor.u32 %s34, %s35
    %p37 = scmp.eq.s32.totalorder %s36, 0
    %s39 = sadd.s32 %s38, 1
    %s40 = scalar_select %p37, %s38, %s39
    %p43 = pneg %p37
    %p44 = scmp.eq.s32.totalorder %s14, 3
    %p45 = por %p43, %p44
    %p46 = scmp.ne.s32.totalorder %s38, %s41
    %p47 = scmp.eq.s32.totalorder %s14, 0
    %p48 = por %p46, %p47
    %p49 = scmp.ne.s32.totalorder %s38, %s41
    %p50 = scmp.eq.s32.totalorder %s19, 3
    %p51 = por %p49, %p50
    %p52 = scmp.ne.s32.totalorder %s41, %s42
    %p53 = scmp.eq.s32.totalorder %s19, 0
    %p54 = por %p52, %p53
    %p55 = scmp.ne.s32.totalorder %s41, %s42
    %p56 = scmp.eq.s32.totalorder %s20, 3
    %p57 = por %p55, %p56
    %p59 = scmp.ne.s32.totalorder %s42, %s58
    %p60 = scmp.eq.s32.totalorder %s20, 0
    %p61 = por %p59, %p60
    %s62 = ssub.s32 %s22, 1
    %p63 = scmp.gt.s32.totalorder %s62, 0
    %s64 = scalar_select %p63, %s62, 0
    %s65 = ssub.s32 %s29, 1
    %p66 = scmp.gt.s32.totalorder %s65, 0
    %s67 = scalar_select %p66, %s65, 0
    %s68 = ssub.s32 %s21, %s33
    %s69 = ssub.s32 %s64, %s67
    %s70 = sor.u32 %s68, %s69
    %p71 = scmp.eq.s32.totalorder %s70, 0
    %s73 = sadd.s32 %s72, 1
    %s74 = scalar_select %p71, %s72, %s73
    %p77 = pneg %p71
    %p78 = scmp.eq.s32.totalorder %s14, 3
    %p79 = por %p77, %p78
    %p80 = scmp.ne.s32.totalorder %s72, %s75
    %p81 = scmp.eq.s32.totalorder %s14, 0
    %p82 = por %p80, %p81
    %p83 = scmp.ne.s32.totalorder %s72, %s75
    %p84 = scmp.eq.s32.totalorder %s19, 3
    %p85 = por %p83, %p84
    %p86 = scmp.ne.s32.totalorder %s75, %s76
    %p87 = scmp.eq.s32.totalorder %s19, 0
    %p88 = por %p86, %p87
    %p89 = scmp.ne.s32.totalorder %s75, %s76
    %p90 = scmp.eq.s32.totalorder %s20, 3
    %p91 = por %p89, %p90
    %p93 = scmp.ne.s32.totalorder %s76, %s92
    %p94 = scmp.eq.s32.totalorder %s20, 0
    %p95 = por %p93, %p94
    %s96 = sadd.s32 %s22, 1
    %p97 = scmp.lt.s32.totalorder %s96, 1
    %s98 = scalar_select %p97, %s96, 1
    %s99 = sadd.s32 %s29, 1
    %p100 = scmp.lt.s32.totalorder %s99, 1
    %s101 = scalar_select %p100, %s99, 1
    %s102 = ssub.s32 %s21, %s33
    %s103 = ssub.s32 %s98, %s101
    %s104 = sor.u32 %s102, %s103
    %p105 = scmp.eq.s32.totalorder %s104, 0
    %s107 = sadd.s32 %s106, 1
    %s108 = scalar_select %p105, %s106, %s107
    %p111 = pneg %p105
    %p112 = scmp.eq.s32.totalorder %s14, 3
    %p113 = por %p111, %p112
    %p114 = scmp.ne.s32.totalorder %s106, %s109
    %p115 = scmp.eq.s32.totalorder %s14, 0
    %p116 = por %p114, %p115
    %p117 = scmp.ne.s32.totalorder %s106, %s109
    %p118 = scmp.eq.s32.totalorder %s19, 3
    %p119 = por %p117, %p118
    %p120 = scmp.ne.s32.totalorder %s109, %s110
    %p121 = scmp.eq.s32.totalorder %s19, 0
    %p122 = por %p120, %p121
    %p123 = scmp.ne.s32.totalorder %s109, %s110
    %p124 = scmp.eq.s32.totalorder %s20, 3
    %p125 = por %p123, %p124
    %p127 = scmp.ne.s32.totalorder %s110, %s126
    %p128 = scmp.eq.s32.totalorder %s20, 0
    %p129 = por %p127, %p128
    %s131 = sadd.s32 %s130, 1
    %p134 = scmp.eq.s32.totalorder %s14, 3
    %p135 = scmp.ne.s32.totalorder %s130, %s132
    %p136 = scmp.eq.s32.totalorder %s14, 0
    %p137 = por %p135, %p136
    %p138 = scmp.ne.s32.totalorder %s130, %s132
    %p139 = scmp.eq.s32.totalorder %s19, 3
    %p140 = por %p138, %p139
    %p141 = scmp.ne.s32.totalorder %s132, %s133
    %p142 = scmp.eq.s32.totalorder %s19, 0
    %p143 = por %p141, %p142
    %p144 = scmp.ne.s32.totalorder %s132, %s133
    %p145 = scmp.eq.s32.totalorder %s20, 3
    %p146 = por %p144, %p145
    %p148 = scmp.ne.s32.totalorder %s133, %s147
    %p149 = scmp.eq.s32.totalorder %s20, 0
    %p150 = por %p148, %p149
    %s152 = sadd.s32 %s151, 1
    %p155 = scmp.eq.s32.totalorder %s14, 3
    %p156 = scmp.ne.s32.totalorder %s151, %s153
    %p157 = scmp.eq.s32.totalorder %s14, 0
    %p158 = por %p156, %p157
    %p159 = scmp.ne.s32.totalorder %s151, %s153
    %p160 = scmp.eq.s32.totalorder %s19, 3
    %p161 = por %p159, %p160
    %p162 = scmp.ne.s32.totalorder %s153, %s154
    %p163 = scmp.eq.s32.totalorder %s19, 0
    %p164 = por %p162, %p163
    %p165 = scmp.ne.s32.totalorder %s153, %s154
    %p166 = scmp.eq.s32.totalorder %s20, 3
    %p167 = por %p165, %p166
    %p169 = scmp.ne.s32.totalorder %s154, %s168
    %p170 = scmp.eq.s32.totalorder %s20, 0
    %p171 = por %p169, %p170
    %s173 = sadd.s32 %s172, 1
    %p176 = scmp.eq.s32.totalorder %s14, 3
    %p177 = scmp.ne.s32.totalorder %s172, %s174
    %p178 = scmp.eq.s32.totalorder %s14, 0
    %p179 = por %p177, %p178
    %p180 = scmp.ne.s32.totalorder %s172, %s174
    %p181 = scmp.eq.s32.totalorder %s19, 3
    %p182 = por %p180, %p181
    %p183 = scmp.ne.s32.totalorder %s174, %s175
    %p184 = scmp.eq.s32.totalorder %s19, 0
    %p185 = por %p183, %p184
    %p186 = scmp.ne.s32.totalorder %s174, %s175
    %p187 = scmp.eq.s32.totalorder %s20, 3
    %p188 = por %p186, %p187
    %p190 = scmp.ne.s32.totalorder %s175, %s189
    %p191 = scmp.eq.s32.totalorder %s20, 0
    %p192 = por %p190, %p191
    %s193 = ssub.s32 %s21, %s33
    %s194 = ssub.s32 %s22, %s29
    %s195 = sor.u32 %s193, %s194
    %p196 = scmp.eq.s32.totalorder %s195, 0
    %s198 = sadd.s32 %s197, 1
    %s199 = scalar_select %p196, %s197, %s198
    %p202 = pneg %p196
    %p203 = scmp.eq.s32.totalorder %s14, 3
    %p204 = por %p202, %p203
    %p205 = scmp.ne.s32.totalorder %s197, %s200
    %p206 = scmp.eq.s32.totalorder %s14, 0
    %p207 = por %p205, %p206
    %p208 = scmp.ne.s32.totalorder %s197, %s200
    %p209 = scmp.eq.s32.totalorder %s19, 3
    %p210 = por %p208, %p209
    %p211 = scmp.ne.s32.totalorder %s200, %s201
    %p212 = scmp.eq.s32.totalorder %s19, 0
    %p213 = por %p211, %p212
    %p214 = scmp.ne.s32.totalorder %s200, %s201
    %p215 = scmp.eq.s32.totalorder %s20, 3
    %p216 = por %p214, %p215
    %p218 = scmp.ne.s32.totalorder %s201, %s217
    %p219 = scmp.eq.s32.totalorder %s20, 0
    %p220 = por %p218, %p219
    %s221 = smul.u32 %s21, 2
    %s222 = sadd.s32 %s221, %s22
    %s223 = smul.u32 %s33, 2
    %s224 = sadd.s32 %s223, %s29
    %s225 = ssub.s32 %s222, %s224
    %p226 = scmp.eq.s32.totalorder %s225, 0
    %s228 = sadd.s32 %s227, 1
    %s229 = scalar_select %p226, %s227, %s228
    %p232 = pneg %p226
    %p233 = scmp.eq.s32.totalorder %s14, 3
    %p234 = por %p232, %p233
    %p235 = scmp.ne.s32.totalorder %s227, %s230
    %p236 = scmp.eq.s32.totalorder %s14, 0
    %p237 = por %p235, %p236
    %p238 = scmp.ne.s32.totalorder %s227, %s230
    %p239 = scmp.eq.s32.totalorder %s19, 3
    %p240 = por %p238, %p239
    %p241 = scmp.ne.s32.totalorder %s230, %s231
    %p242 = scmp.eq.s32.totalorder %s19, 0
    %p243 = por %p241, %p242
    %p244 = scmp.ne.s32.totalorder %s230, %s231
    %p245 = scmp.eq.s32.totalorder %s20, 3
    %p246 = por %p244, %p245
    %p248 = scmp.ne.s32.totalorder %s231, %s247
    %p249 = scmp.eq.s32.totalorder %s20, 0
    %p250 = por %p248, %p249
    %p251 = scmp.le.s32.totalorder 1, %s14
    %p252 = scmp.lt.s32.totalorder %s14, 5
    %p253 = pnand %p251, %p252
    %p254 = pneg %p253
    // Predicated region
    $region9: #{basic_block_forward.3} parent=5 // pred_check
      _
    $region10: #{basic_block_forward.3} parent=5 // pred_check_branch
      %256 = sbr.rel (%p253) target = $region12
    $region11: #{basic_block_forward.3} parent=5 // pred_region
      %s257 = ssub.s32 %s14, 1
      // Predicated region
      $region13: #{basic_block_forward.3} parent=11 // pred_check
        %p258 = pneg %p143
      $region14: #{basic_block_forward.3} parent=11 // pred_check_branch
        %260 = sbr.rel (%p258) target = $region16
      $region15: #{basic_block_forward.3} parent=11 // pred_region
        _
      $region16: #{basic_block_forward.3} parent=11 // pred_fallthru
        _
      // Predicated region
      $region17: #{basic_block_forward.3} parent=11 // pred_check
        %p261 = pneg %p164
      $region18: #{basic_block_forward.3} parent=11 // pred_check_branch
        %263 = sbr.rel (%p261) target = $region20
      $region19: #{basic_block_forward.3} parent=11 // pred_region
        _
      $region20: #{basic_block_forward.3} parent=11 // pred_fallthru
        _
      // Predicated region
      $region21: #{basic_block_forward.3} parent=11 // pred_check
        %p264 = pneg %p185
      $region22: #{basic_block_forward.3} parent=11 // pred_check_branch
        %266 = sbr.rel (%p264) target = $region24
      $region23: #{basic_block_forward.3} parent=11 // pred_region
        _
      $region24: #{basic_block_forward.3} parent=11 // pred_fallthru
        _
    $region12: #{basic_block_forward.3} parent=5 // pred_fallthru
      _
    %p267 = scmp.lt.s32.totalorder %s14, 4
    // Predicated region
    $region25: #{basic_block_forward.3} parent=5 // pred_check
      %p268 = pneg %p267
    $region26: #{basic_block_forward.3} parent=5 // pred_check_branch
      %270 = sbr.rel (%p268) target = $region28
    $region27: #{basic_block_forward.3} parent=5 // pred_region
      // Predicated region
      $region29: #{basic_block_forward.3} parent=27 // pred_check
        %p271 = pneg %p48
      $region30: #{basic_block_forward.3} parent=27 // pred_check_branch
        %273 = sbr.rel (%p271) target = $region32
      $region31: #{basic_block_forward.3} parent=27 // pred_region
        %p274 = scmp.lt.s32.totalorder %s21, 1
        %s275 = scalar_select %p274, %s21, 1
        %p276 = scmp.lt.s32.totalorder %s22, 1
        %s277 = scalar_select %p276, %s22, 1
        %s278 = smul.addr %s275, 2
        %s279 = sadd.s32 %s277, %s278
        %s280 = smul.addr %s279, 8
        %s281 = scalar_lea.vmem %s0, %s280
      $region32: #{basic_block_forward.3} parent=27 // pred_fallthru
        _
      // Predicated region
      $region33: #{basic_block_forward.3} parent=27 // pred_check
        %p282 = pneg %p82
      $region34: #{basic_block_forward.3} parent=27 // pred_check_branch
        %284 = sbr.rel (%p282) target = $region36
      $region35: #{basic_block_forward.3} parent=27 // pred_region
        %s285 = ssub.s32 %s22, 1
        %p286 = scmp.gt.s32.totalorder %s285, 0
        %s287 = scalar_select %p286, %s285, 0
        %p288 = scmp.lt.s32.totalorder %s21, 1
        %s289 = scalar_select %p288, %s21, 1
        %p290 = scmp.lt.s32.totalorder %s287, 1
        %s291 = scalar_select %p290, %s287, 1
        %s292 = smul.addr %s289, 2
        %s293 = sadd.s32 %s291, %s292
        %s294 = smul.addr %s293, 8
        %s295 = scalar_lea.vmem %s1, %s294
        %s296 = ssub.s32 %s22, 1
        %p297 = scmp.gt.s32.totalorder %s296, 0
        %s298 = scalar_select %p297, %s296, 0
      $region36: #{basic_block_forward.3} parent=27 // pred_fallthru
        _
      // Predicated region
      $region37: #{basic_block_forward.3} parent=27 // pred_check
        %p299 = pneg %p116
      $region38: #{basic_block_forward.3} parent=27 // pred_check_branch
        %301 = sbr.rel (%p299) target = $region40
      $region39: #{basic_block_forward.3} parent=27 // pred_region
        %s302 = sadd.s32 %s22, 1
        %p303 = scmp.lt.s32.totalorder %s302, 1
        %s304 = scalar_select %p303, %s302, 1
        %p305 = scmp.lt.s32.totalorder %s21, 1
        %s306 = scalar_select %p305, %s21, 1
        %p307 = scmp.lt.s32.totalorder %s304, 1
        %s308 = scalar_select %p307, %s304, 1
        %s309 = smul.addr %s306, 2
        %s310 = sadd.s32 %s308, %s309
        %s311 = smul.addr %s310, 8
        %s312 = scalar_lea.vmem %s2, %s311
        %s313 = sadd.s32 %s22, 1
        %p314 = scmp.lt.s32.totalorder %s313, 1
        %s315 = scalar_select %p314, %s313, 1
      $region40: #{basic_block_forward.3} parent=27 // pred_fallthru
        _
    $region28: #{basic_block_forward.3} parent=5 // pred_fallthru
      _
    %p316 = scmp.le.s32.totalorder 1, %s14
    %p317 = scmp.lt.s32.totalorder %s14, 5
    %p318 = pnand %p316, %p317
    %p319 = pneg %p318
    // Predicated region
    $region41: #{basic_block_forward.3} parent=5 // pred_check
      _
    $region42: #{basic_block_forward.3} parent=5 // pred_check_branch
      %321 = sbr.rel (%p318) target = $region44
    $region43: #{basic_block_forward.3} parent=5 // pred_region
      %s322 = ssub.s32 %s14, 1
      %p323 = scmp.lt.s32.totalorder %s23, 1
      %s324 = scalar_select %p323, %s23, 1
      %p325 = scmp.lt.s32.totalorder %s24, 1
      %s326 = scalar_select %p325, %s24, 1
      %s327 = smul.addr %s324, 2
      %s328 = sadd.s32 %s326, %s327
      %s329 = smul.addr %s328, 8
      %s330 = scalar_lea.vmem %s0, %s329
      %p331 = pneg %p54
      %p332 = pneg %p51
      %s333 = ssub.s32 %s24, 1
      %p334 = scmp.gt.s32.totalorder %s333, 0
      %s335 = scalar_select %p334, %s333, 0
      %p336 = scmp.lt.s32.totalorder %s23, 1
      %s337 = scalar_select %p336, %s23, 1
      %p338 = scmp.lt.s32.totalorder %s335, 1
      %s339 = scalar_select %p338, %s335, 1
      %s340 = smul.addr %s337, 2
      %s341 = sadd.s32 %s339, %s340
      %s342 = smul.addr %s341, 8
      %s343 = scalar_lea.vmem %s1, %s342
      %p344 = pneg %p88
      %p345 = pneg %p85
      %s346 = sadd.s32 %s24, 1
      %p347 = scmp.lt.s32.totalorder %s346, 1
      %s348 = scalar_select %p347, %s346, 1
      %p349 = scmp.lt.s32.totalorder %s23, 1
      %s350 = scalar_select %p349, %s23, 1
      %p351 = scmp.lt.s32.totalorder %s348, 1
      %s352 = scalar_select %p351, %s348, 1
      %s353 = smul.addr %s350, 2
      %s354 = sadd.s32 %s352, %s353
      %s355 = smul.addr %s354, 8
      %s356 = scalar_lea.vmem %s2, %s355
      %p357 = pneg %p122
      %p358 = pneg %p119
      %p359 = pneg %p143
      %p360 = pneg %p140
      %p361 = pneg %p164
      %p362 = pneg %p161
      %p363 = pneg %p185
      %p364 = pneg %p182
      %p365 = pneg %p213
      %p366 = pneg %p210
      %p367 = scmp.lt.s32.totalorder %s23, 1
      %s368 = scalar_select %p367, %s23, 1
      %p369 = scmp.lt.s32.totalorder %s24, 1
      %s370 = scalar_select %p369, %s24, 1
      %s371 = smul.addr %s368, 2
      %s372 = sadd.s32 %s370, %s371
      %s373 = smul.addr %s372, 8
      %s374 = scalar_lea.vmem %s6, %s373
      %p375 = pneg %p243
      %p376 = pneg %p240
      %s377 = smul.u32 %s23, 2
      %s378 = sadd.s32 %s377, %s24
      %p379 = scmp.lt.s32.totalorder %s378, 3
      %s380 = scalar_select %p379, %s378, 3
      %s381 = smul.addr %s380, 2
      %s382 = scalar_lea.vmem %s7, %s381
      %p383 = scmp.lt.s32.totalorder %s23, 1
      %s384 = scalar_select %p383, %s23, 1
      %p385 = scmp.lt.s32.totalorder %s24, 1
      %s386 = scalar_select %p385, %s24, 1
      %s387 = smul.addr %s384, 2
      %s388 = sadd.s32 %s386, %s387
      %s389 = smul.addr %s388, 8
      %s390 = scalar_lea.vmem %s0, %s389
      %s391 = ssub.s32 %s24, 1
      %p392 = scmp.gt.s32.totalorder %s391, 0
      %s393 = scalar_select %p392, %s391, 0
      %p394 = scmp.lt.s32.totalorder %s23, 1
      %s395 = scalar_select %p394, %s23, 1
      %p396 = scmp.lt.s32.totalorder %s393, 1
      %s397 = scalar_select %p396, %s393, 1
      %s398 = smul.addr %s395, 2
      %s399 = sadd.s32 %s397, %s398
      %s400 = smul.addr %s399, 8
      %s401 = scalar_lea.vmem %s1, %s400
      %s402 = ssub.s32 %s24, 1
      %p403 = scmp.gt.s32.totalorder %s402, 0
      %s404 = scalar_select %p403, %s402, 0
      %s405 = sadd.s32 %s24, 1
      %p406 = scmp.lt.s32.totalorder %s405, 1
      %s407 = scalar_select %p406, %s405, 1
      %p408 = scmp.lt.s32.totalorder %s23, 1
      %s409 = scalar_select %p408, %s23, 1
      %p410 = scmp.lt.s32.totalorder %s407, 1
      %s411 = scalar_select %p410, %s407, 1
      %s412 = smul.addr %s409, 2
      %s413 = sadd.s32 %s411, %s412
      %s414 = smul.addr %s413, 8
      %s415 = scalar_lea.vmem %s2, %s414
      %s416 = sadd.s32 %s24, 1
      %p417 = scmp.lt.s32.totalorder %s416, 1
      %s418 = scalar_select %p417, %s416, 1
      %p419 = scmp.lt.s32.totalorder %s23, 1
      %s420 = scalar_select %p419, %s23, 1
      %p421 = scmp.lt.s32.totalorder %s24, 1
      %s422 = scalar_select %p421, %s24, 1
      %s423 = smul.addr %s420, 2
      %s424 = sadd.s32 %s422, %s423
      %s425 = smul.addr %s424, 8
      %s426 = scalar_lea.vmem %s6, %s425
      %s427 = smul.u32 %s23, 2
      %s428 = sadd.s32 %s427, %s24
      %p429 = scmp.lt.s32.totalorder %s428, 3
      %s430 = scalar_select %p429, %s428, 3
      %s431 = smul.addr %s430, 2
      %s432 = scalar_lea.vmem %s7, %s431
      %s433 = smul.u32 %s23, 2
      %s434 = sadd.s32 %s433, %s24
      %v436 = vld [vmem:[%s390] sm:$0xff]
      %vm437 = vcmask 523264
      %438 = vst.msk [vmem:[#allocation2 + $0x1] sm:$0xff] %vm437, %v436
      %p439 = scmp.eq.s32.totalorder %s24, 0
      %v440 = vld [vmem:[%s401 + $0x7] sm:$0x1]
      %s441 = scalar_select %p439, 1, 0
      %v442 = vstv %s441
      %vm443 = vcmp.eq.s32.totalorder %v442, 1
      %v444 = vsel %vm443, 0.0, %v440
      %vm445 = vcmask 516096
      %446 = vst.msk [vmem:[#allocation2] sm:$0x1] %vm445, %v444
      %p447 = scmp.eq.s32.totalorder %s24, 1
      %v448 = vld [vmem:[%s415] sm:$0x1]
      %s449 = scalar_select %p447, 1, 0
      %v450 = vstv %s449
      %vm451 = vcmp.eq.s32.totalorder %v450, 1
      %v452 = vsel %vm451, 0.0, %v448
      %453 = vst.msk [vmem:[#allocation2 + $0x9] sm:$0x1] %vm445, %v452
      %v454 = vld [vmem:[#allocation2] sm:$0xff]
      %v455 = vld [vmem:[#allocation2 + $0x8] sm:$0x3]
      %v456 = vpack.c.bf16 %v455, %v454
      %v457 = vld [vmem:[%s3] sm:$0xf]
      %v458 = vld [vmem:[%s3 + $0x4] sm:$0xf]
      %v459 = vld [vmem:[%s3 + $0x8] sm:$0xf]
      %v460 = vld [vmem:[%s3 + $0xc] sm:$0xf]
      %v461 = vld [vmem:[%s3 + $0x10] sm:$0xf]
      %v462 = vld [vmem:[%s3 + $0x14] sm:$0xf]
      %v463 = vld [vmem:[%s3 + $0x18] sm:$0xf]
      %v464 = vld [vmem:[%s3 + $0x1c] sm:$0xf]
      %s465 = scalar_lea.vmem %s3, 32
      %v466 = vld [vmem:[%s465] sm:$0xf]
      %v467 = vld [vmem:[%s465 + $0x4] sm:$0xf]
      %v468 = vld [vmem:[%s465 + $0x8] sm:$0xf]
      %v469 = vld [vmem:[%s465 + $0xc] sm:$0xf]
      %v470 = vld [vmem:[%s465 + $0x10] sm:$0xf]
      %v471 = vld [vmem:[%s465 + $0x14] sm:$0xf]
      %v472 = vld [vmem:[%s465 + $0x18] sm:$0xf]
      %v473 = vld [vmem:[%s465 + $0x1c] sm:$0xf]
      %v475 = vshrl.u32 %v456, 16
      %v477 = vshll.u32 %v456, 16
      %v479 = vrot.slane %v477, 1
      %v480 = vor.u32 %v475, %v479
      %v489 = vunpack.c.l.b16 %v466
      %v490 = vunpack.c.l.b16 %v467
      %v491 = vunpack.c.l.b16 %v468
      %v492 = vunpack.c.l.b16 %v469
      %v493 = vunpack.c.l.b16 %v470
      %v494 = vunpack.c.l.b16 %v471
      %v495 = vunpack.c.l.b16 %v472
      %v496 = vunpack.c.l.b16 %v473
      %v497 = vpack.c.b16 %v490, %v489
      %v498 = vpack.c.b16 %v492, %v491
      %v499 = vpack.c.b16 %v494, %v493
      %v500 = vpack.c.b16 %v496, %v495
      %v506 = vsel %vm437, %v480, 0
      %508 = vmatprep.subr.bf16.mxu0 0
      %509 = vmatpush1.bf16.msra.mxu0 0
      %510 = vmatprep.subr.bf16.mxu0 0
      %511 = vmatpush1.bf16.msra.mxu0 0
      %512 = vmatprep.subr.bf16.mxu0 0
      %513 = vmatpush1.bf16.msra.mxu0 0
      %514 = vmatprep.subr.bf16.mxu0 0
      %515 = vmatpush1.bf16.msra.mxu0 0
      %516 = vmatprep.subr.bf16.mxu0 0
      %517 = vmatpush1.bf16.msra.mxu0 %v500
      %518 = vmatprep.subr.bf16.mxu0 0
      %519 = vmatpush1.bf16.msra.mxu0 %v499
      %520 = vmatprep.subr.bf16.mxu0 0
      %521 = vmatpush1.bf16.msra.mxu0 %v498
      %522 = vmatprep.subr.bf16.mxu0 0
      %523 = vmatpush1.bf16.msra.mxu0 %v497
      %524 = vmatprep.subr.bf16.mxu0 0
      %525 = vmatpush2.bf16.msra.mxu0 0
      %526 = vmatprep.subr.bf16.mxu0 0
      %527 = vmatpush2.bf16.msra.mxu0 0
      %528 = vmatprep.subr.bf16.mxu0 0
      %529 = vmatpush2.bf16.msra.mxu0 0
      %530 = vmatprep.subr.bf16.mxu0 0
      %531 = vmatpush2.bf16.msra.mxu0 0
      %532 = vmatprep.subr.bf16.mxu0 0
      %533 = vmatpush2.bf16.msra.mxu0 0
      %534 = vmatprep.subr.bf16.mxu0 0
      %535 = vmatpush2.bf16.msra.mxu0 0
      %536 = vmatprep.subr.bf16.mxu0 0
      %537 = vmatpush2.bf16.msra.mxu0 0
      %538 = vmatprep.subr.bf16.mxu0 0
      %539 = vmatpush2.bf16.msra.mxu0 0
      %540 = vmatprep.mubr.bf16.mxu0 0
      %541 = vmatmul.mubr.bf16.gmra.mxu0 %v506
      %v542 = vpop.f32.mrf.mxu0
      %v543 = vadd.f32 0.0, %v542
      %v544 = vpop.f32.mrf.mxu0
      %v545 = vpop.f32.mrf.mxu0
      %v546 = vpop.f32.mrf.mxu0
      %547 = vdwg.mxu0
      %v556 = vunpack.c.l.b16 %v457
      %v557 = vunpack.c.l.b16 %v458
      %v558 = vunpack.c.l.b16 %v459
      %v559 = vunpack.c.l.b16 %v460
      %v560 = vunpack.c.l.b16 %v461
      %v561 = vunpack.c.l.b16 %v462
      %v562 = vunpack.c.l.b16 %v463
      %v563 = vunpack.c.l.b16 %v464
      %v564 = vpack.c.b16 %v557, %v556
      %v565 = vpack.c.b16 %v559, %v558
      %v566 = vpack.c.b16 %v561, %v560
      %v567 = vpack.c.b16 %v563, %v562
      %v572 = vsel %vm437, %v456, 0
      %574 = vmatprep.subr.bf16.mxu0 0
      %575 = vmatpush1.bf16.msra.mxu0 0
      %576 = vmatprep.subr.bf16.mxu0 0
      %577 = vmatpush1.bf16.msra.mxu0 0
      %578 = vmatprep.subr.bf16.mxu0 0
      %579 = vmatpush1.bf16.msra.mxu0 0
      %580 = vmatprep.subr.bf16.mxu0 0
      %581 = vmatpush1.bf16.msra.mxu0 0
      %582 = vmatprep.subr.bf16.mxu0 0
      %583 = vmatpush1.bf16.msra.mxu0 %v567
      %584 = vmatprep.subr.bf16.mxu0 0
      %585 = vmatpush1.bf16.msra.mxu0 %v566
      %586 = vmatprep.subr.bf16.mxu0 0
      %587 = vmatpush1.bf16.msra.mxu0 %v565
      %588 = vmatprep.subr.bf16.mxu0 0
      %589 = vmatpush1.bf16.msra.mxu0 %v564
      %590 = vmatprep.subr.bf16.mxu0 0
      %591 = vmatpush2.bf16.msra.mxu0 0
      %592 = vmatprep.subr.bf16.mxu0 0
      %593 = vmatpush2.bf16.msra.mxu0 0
      %594 = vmatprep.subr.bf16.mxu0 0
      %595 = vmatpush2.bf16.msra.mxu0 0
      %596 = vmatprep.subr.bf16.mxu0 0
      %597 = vmatpush2.bf16.msra.mxu0 0
      %598 = vmatprep.subr.bf16.mxu0 0
      %599 = vmatpush2.bf16.msra.mxu0 0
      %600 = vmatprep.subr.bf16.mxu0 0
      %601 = vmatpush2.bf16.msra.mxu0 0
      %602 = vmatprep.subr.bf16.mxu0 0
      %603 = vmatpush2.bf16.msra.mxu0 0
      %604 = vmatprep.subr.bf16.mxu0 0
      %605 = vmatpush2.bf16.msra.mxu0 0
      %606 = vmatprep.mubr.bf16.mxu0 0
      %607 = vmatmul.mubr.bf16.gmra.mxu0 %v572
      %v608 = vpop.f32.mrf.mxu0
      %v609 = vadd.f32 %v543, %v608
      %v610 = vpop.f32.mrf.mxu0
      %v611 = vpop.f32.mrf.mxu0
      %v612 = vpop.f32.mrf.mxu0
      %613 = vdwg.mxu0
      %s614 = scalar_lea.vmem %s3, 64
      %v615 = vld [vmem:[%s614] sm:$0xf]
      %v616 = vld [vmem:[%s614 + $0x4] sm:$0xf]
      %v617 = vld [vmem:[%s614 + $0x8] sm:$0xf]
      %v618 = vld [vmem:[%s614 + $0xc] sm:$0xf]
      %v619 = vld [vmem:[%s614 + $0x10] sm:$0xf]
      %v620 = vld [vmem:[%s614 + $0x14] sm:$0xf]
      %v621 = vld [vmem:[%s614 + $0x18] sm:$0xf]
      %v622 = vld [vmem:[%s614 + $0x1c] sm:$0xf]
      %v624 = vrot.slane %v456, 1
      %v633 = vunpack.c.l.b16 %v615
      %v634 = vunpack.c.l.b16 %v616
      %v635 = vunpack.c.l.b16 %v617
      %v636 = vunpack.c.l.b16 %v618
      %v637 = vunpack.c.l.b16 %v619
      %v638 = vunpack.c.l.b16 %v620
      %v639 = vunpack.c.l.b16 %v621
      %v640 = vunpack.c.l.b16 %v622
      %v641 = vpack.c.b16 %v634, %v633
      %v642 = vpack.c.b16 %v636, %v635
      %v643 = vpack.c.b16 %v638, %v637
      %v644 = vpack.c.b16 %v640, %v639
      %v650 = vsel %vm437, %v624, 0
      %652 = vmatprep.subr.bf16.mxu0 0
      %653 = vmatpush1.bf16.msra.mxu0 0
      %654 = vmatprep.subr.bf16.mxu0 0
      %655 = vmatpush1.bf16.msra.mxu0 0
      %656 = vmatprep.subr.bf16.mxu0 0
      %657 = vmatpush1.bf16.msra.mxu0 0
      %658 = vmatprep.subr.bf16.mxu0 0
      %659 = vmatpush1.bf16.msra.mxu0 0
      %660 = vmatprep.subr.bf16.mxu0 0
      %661 = vmatpush1.bf16.msra.mxu0 %v644
      %662 = vmatprep.subr.bf16.mxu0 0
      %663 = vmatpush1.bf16.msra.mxu0 %v643
      %664 = vmatprep.subr.bf16.mxu0 0
      %665 = vmatpush1.bf16.msra.mxu0 %v642
      %666 = vmatprep.subr.bf16.mxu0 0
      %667 = vmatpush1.bf16.msra.mxu0 %v641
      %668 = vmatprep.subr.bf16.mxu0 0
      %669 = vmatpush2.bf16.msra.mxu0 0
      %670 = vmatprep.subr.bf16.mxu0 0
      %671 = vmatpush2.bf16.msra.mxu0 0
      %672 = vmatprep.subr.bf16.mxu0 0
      %673 = vmatpush2.bf16.msra.mxu0 0
      %674 = vmatprep.subr.bf16.mxu0 0
      %675 = vmatpush2.bf16.msra.mxu0 0
      %676 = vmatprep.subr.bf16.mxu0 0
      %677 = vmatpush2.bf16.msra.mxu0 0
      %678 = vmatprep.subr.bf16.mxu0 0
      %679 = vmatpush2.bf16.msra.mxu0 0
      %680 = vmatprep.subr.bf16.mxu0 0
      %681 = vmatpush2.bf16.msra.mxu0 0
      %682 = vmatprep.subr.bf16.mxu0 0
      %683 = vmatpush2.bf16.msra.mxu0 0
      %684 = vmatprep.mubr.bf16.mxu0 0
      %685 = vmatmul.mubr.bf16.gmra.mxu0 %v650
      %v686 = vpop.f32.mrf.mxu0
      %v687 = vadd.f32 0.0, %v686
      %v688 = vpop.f32.mrf.mxu0
      %v689 = vpop.f32.mrf.mxu0
      %v690 = vpop.f32.mrf.mxu0
      %691 = vdwg.mxu0
      %v692 = vadd.f32 %v609, %v687
      %v693 = vrot.slane %v692, 4
      %v694 = vadd.f32 %v692, %v693
      %v695 = vrot.slane %v694, 2
      %v696 = vadd.f32 %v694, %v695
      %v697 = vrot.slane %v696, 1
      %v698 = vadd.f32 %v696, %v697
      %699 = vst [vmem:[%s432] sm:$0x1] %v698
      %v700 = vmul.f32 %v692, %v692
      %v701 = vrot.slane %v700, 4
      %v702 = vadd.f32 %v700, %v701
      %v703 = vrot.slane %v702, 2
      %v704 = vadd.f32 %v702, %v703
      %v705 = vrot.slane %v704, 1
      %v706 = vadd.f32 %v704, %v705
      %707 = vst [vmem:[%s432 + $0x1] sm:$0x1] %v706
      %708 = vst [vmem:[%s426] sm:$0xff] %v692
      %p709 = scmp.lt.s32.totalorder %s23, 1
      %s710 = scalar_select %p709, %s23, 1
      %p711 = scmp.lt.s32.totalorder %s24, 1
      %s712 = scalar_select %p711, %s24, 1
      %s713 = smul.addr %s710, 2
      %s714 = sadd.s32 %s712, %s713
      %s715 = smul.addr %s714, 8
      %s716 = scalar_lea.vmem %s6, %s715
      %s717 = smul.u32 %s23, 2
      %s718 = sadd.s32 %s717, %s24
      %p719 = scmp.lt.s32.totalorder %s718, 3
      %s720 = scalar_select %p719, %s718, 3
      %s721 = smul.addr %s720, 2
      %s722 = scalar_lea.vmem %s7, %s721
      // Predicated region
      $region45: #{basic_block_forward.3} parent=43 // pred_check
        %p723 = pneg %p210
      $region46: #{basic_block_forward.3} parent=43 // pred_check_branch
        %725 = sbr.rel (%p723) target = $region48
      $region47: #{basic_block_forward.3} parent=43 // pred_region
        _
      $region48: #{basic_block_forward.3} parent=43 // pred_fallthru
        _
      // Predicated region
      $region49: #{basic_block_forward.3} parent=43 // pred_check
        %p726 = pneg %p240
      $region50: #{basic_block_forward.3} parent=43 // pred_check_branch
        %728 = sbr.rel (%p726) target = $region52
      $region51: #{basic_block_forward.3} parent=43 // pred_region
        %s729 = smul.u32 %s23, 2
        %s730 = sadd.s32 %s729, %s24
      $region52: #{basic_block_forward.3} parent=43 // pred_fallthru
        _
    $region44: #{basic_block_forward.3} parent=5 // pred_fallthru
      _
    %p731 = scmp.le.s32.totalorder 2, %s14
    // Predicated region
    $region53: #{basic_block_forward.3} parent=5 // pred_check
      %p732 = pneg %p731
    $region54: #{basic_block_forward.3} parent=5 // pred_check_branch
      %734 = sbr.rel (%p732) target = $region56
    $region55: #{basic_block_forward.3} parent=5 // pred_region
      %s735 = ssub.s32 %s14, 2
      // Predicated region
      $region57: #{basic_block_forward.3} parent=55 // pred_check
        %p736 = pneg %p216
      $region58: #{basic_block_forward.3} parent=55 // pred_check_branch
        %738 = sbr.rel (%p736) target = $region60
      $region59: #{basic_block_forward.3} parent=55 // pred_region
        %p739 = scmp.lt.s32.totalorder %s25, 1
        %s740 = scalar_select %p739, %s25, 1
        %p741 = scmp.lt.s32.totalorder %s26, 1
        %s742 = scalar_select %p741, %s26, 1
        %s743 = smul.addr %s740, 2
        %s744 = sadd.s32 %s742, %s743
        %s745 = smul.addr %s744, 8
        %s746 = scalar_lea.vmem %s6, %s745
      $region60: #{basic_block_forward.3} parent=55 // pred_fallthru
        _
      // Predicated region
      $region61: #{basic_block_forward.3} parent=55 // pred_check
        %p747 = pneg %p246
      $region62: #{basic_block_forward.3} parent=55 // pred_check_branch
        %749 = sbr.rel (%p747) target = $region64
      $region63: #{basic_block_forward.3} parent=55 // pred_region
        %s750 = smul.u32 %s25, 2
        %s751 = sadd.s32 %s750, %s26
        %p752 = scmp.lt.s32.totalorder %s751, 3
        %s753 = scalar_select %p752, %s751, 3
        %s754 = smul.addr %s753, 2
        %s755 = scalar_lea.vmem %s7, %s754
      $region64: #{basic_block_forward.3} parent=55 // pred_fallthru
        _
    $region56: #{basic_block_forward.3} parent=5 // pred_fallthru
      _
  $region6: #{basic_block_forward.3} parent=0 // loop_footer
    %s18 = sadd.s32 1, %s14
  $region7: #{basic_block_forward.3} parent=0 // loop_footer_branch
    %13 = sbr.rel target = $region3
  $region8: #{basic_block_forward.3} parent=0 // loop_exit
    _

// kernel: tile.28
$region0: #{tile.28}
  #allocation0 [shape = 's32[1]{0}', space=sflag, size = 0x4, scoped, tag = 'scoped memory for tile.28']
  %s0 = inlined_call_operand.vmem [shape: f32[8], index: 0, kind: input, shape index: {}]
  %s1 = inlined_call_operand.vmem [shape: f32[16,8], index: 1, kind: output, shape index: {}]
  // Predicated region
  $region2: #{tile.28} parent=0 // pred_check
    _
  $region3: #{tile.28} parent=0 // pred_check_branch
    %3 = sbr.rel (0) target = $region5
  $region4: #{tile.28} parent=0 // pred_region
    _
  $region5: #{tile.28} parent=0 // pred_fallthru
    _
  %v4 = vld [vmem:[%s0] ss:$0 sm:$0xff]
  %5 = vst [vmem:[%s1] sm:$0xff] %v4
  %s6 = scalar_lea.vmem %s1, 8
  %7 = vst [vmem:[%s6] sm:$0xff] %v4

// kernel: tile.29
$region0: #{tile.29}
  %s0 = inlined_call_operand.vmem [shape: f32[16,8], index: 0, kind: input, shape index: {}]
  %s1 = inlined_call_operand.vmem [shape: f32[1,128], index: 1, kind: output, shape index: {}]
  $region1: #{tile.29} parent=0
    #allocation0 [shape = 'u8[4096]{0}', space=vmem, size = 0x1000, scoped, tag = 'scoped mem for output reshape']
    %v2 = vld [vmem:[%s0] sm:$0x1]
    %vm3 = vcmask 64512
    %4 = vst.msk [vmem:[#allocation0] sm:$0x1] %vm3, %v2
    %s5 = scalar_lea.vmem %s0, 15
    %v6 = vld [vmem:[%s5] sm:$0x1]
    %7 = vrot.lane.b32.xlu0 %v6, 120
    %v8 = vpop.permute.xlu0 %7
    %vm9 = vcmask 1048512
    %10 = vst.msk [vmem:[#allocation0] sm:$0x1] %vm9, %v8
    %s11 = scalar_lea.vmem %s0, 14
    %v12 = vld [vmem:[%s11] sm:$0x1]
    %13 = vrot.lane.b32.xlu0 %v12, 112
    %v14 = vpop.permute.xlu0 %13
    %vm15 = vcmask 982912
    %16 = vst.msk [vmem:[#allocation0] sm:$0x1] %vm15, %v14
    %s17 = scalar_lea.vmem %s0, 13
    %v18 = vld [vmem:[%s17] sm:$0x1]
    %19 = vrot.lane.b32.xlu0 %v18, 104
    %v20 = vpop.permute.xlu0 %19
    %vm21 = vcmask 917312
    %22 = vst.msk [vmem:[#allocation0] sm:$0x1] %vm21, %v20
    %s23 = scalar_lea.vmem %s0, 12
    %v24 = vld [vmem:[%s23] sm:$0x1]
    %25 = vrot.lane.b32.xlu0 %v24, 96
    %v26 = vpop.permute.xlu0 %25
    %vm27 = vcmask 851712
    %28 = vst.msk [vmem:[#allocation0] sm:$0x1] %vm27, %v26
    %s29 = scalar_lea.vmem %s0, 11
    %v30 = vld [vmem:[%s29] sm:$0x1]
    %31 = vrot.lane.b32.xlu0 %v30, 88
    %v32 = vpop.permute.xlu0 %31
    %vm33 = vcmask 786112
    %34 = vst.msk [vmem:[#allocation0] sm:$0x1] %vm33, %v32
    %s35 = scalar_lea.vmem %s0, 10
    %v36 = vld [vmem:[%s35] sm:$0x1]
    %37 = vrot.lane.b32.xlu0 %v36, 80
    %v38 = vpop.permute.xlu0 %37
    %vm39 = vcmask 720512
    %40 = vst.msk [vmem:[#allocation0] sm:$0x1] %vm39, %v38
    %s41 = scalar_lea.vmem %s0, 9
    %v42 = vld [vmem:[%s41] sm:$0x1]
    %43 = vrot.lane.b32.xlu0 %v42, 72
    %v44 = vpop.permute.xlu0 %43
    %vm45 = vcmask 654912
    %46 = vst.msk [vmem:[#allocation0] sm:$0x1] %vm45, %v44
    %s47 = scalar_lea.vmem %s0, 8
    %v48 = vld [vmem:[%s47] sm:$0x1]
    %49 = vrot.lane.b32.xlu0 %v48, 64
    %v50 = vpop.permute.xlu0 %49
    %vm51 = vcmask 589312
    %52 = vst.msk [vmem:[#allocation0] sm:$0x1] %vm51, %v50
    %s53 = scalar_lea.vmem %s0, 7
    %v54 = vld [vmem:[%s53] sm:$0x1]
    %55 = vrot.lane.b32.xlu0 %v54, 56
    %v56 = vpop.permute.xlu0 %55
    %vm57 = vcmask 523712
    %58 = vst.msk [vmem:[#allocation0] sm:$0x1] %vm57, %v56
    %s59 = scalar_lea.vmem %s0, 6
    %v60 = vld [vmem:[%s59] sm:$0x1]
    %61 = vrot.lane.b32.xlu0 %v60, 48
    %v62 = vpop.permute.xlu0 %61
    %vm63 = vcmask 458112
    %64 = vst.msk [vmem:[#allocation0] sm:$0x1] %vm63, %v62
    %s65 = scalar_lea.vmem %s0, 5
    %v66 = vld [vmem:[%s65] sm:$0x1]
    %67 = vrot.lane.b32.xlu0 %v66, 40
    %v68 = vpop.permute.xlu0 %67
    %vm69 = vcmask 392512
    %70 = vst.msk [vmem:[#allocation0] sm:$0x1] %vm69, %v68
    %s71 = scalar_lea.vmem %s0, 4
    %v72 = vld [vmem:[%s71] sm:$0x1]
    %73 = vrot.lane.b32.xlu0 %v72, 32
    %v74 = vpop.permute.xlu0 %73
    %vm75 = vcmask 326912
    %76 = vst.msk [vmem:[#allocation0] sm:$0x1] %vm75, %v74
    %s77 = scalar_lea.vmem %s0, 3
    %v78 = vld [vmem:[%s77] sm:$0x1]
    %79 = vrot.lane.b32.xlu0 %v78, 24
    %v80 = vpop.permute.xlu0 %79
    %vm81 = vcmask 261312
    %82 = vst.msk [vmem:[#allocation0] sm:$0x1] %vm81, %v80
    %s83 = scalar_lea.vmem %s0, 2
    %v84 = vld [vmem:[%s83] sm:$0x1]
    %85 = vrot.lane.b32.xlu0 %v84, 16
    %v86 = vpop.permute.xlu0 %85
    %vm87 = vcmask 195712
    %88 = vst.msk [vmem:[#allocation0] sm:$0x1] %vm87, %v86
    %s89 = scalar_lea.vmem %s0, 1
    %v90 = vld [vmem:[%s89] sm:$0x1]
    %91 = vrot.lane.b32.xlu0 %v90, 8
    %v92 = vpop.permute.xlu0 %91
    %vm93 = vcmask 130112
    %94 = vst.msk [vmem:[#allocation0] sm:$0x1] %vm93, %v92
    %s96 = sshll.u32 1, 1
    %s97 = ssub.s32 %s96, 1
    %v99 = vld [vmem:[#allocation0] sm:%s97]
    %s100 = sshll.u32 1, 1
    %s101 = ssub.s32 %s100, 1
    %102 = vst [vmem:[%s1] sm:%s101] %v99

// kernel: basic_block_forward.4
$region0: #{basic_block_forward.4}
  #allocation0 [shape = 'u32[]', space=smem, size = 0x4, offset = 0x4, fixed_abs, tag = 'smem constant byte address 0x4 - core index']
  #allocation1 [shape = 'u32[144,128]{1,0:T(1,128)}', space=vmem, size = 0x12000, scoped, tag = 'internal scratch']
  #allocation2 [shape = 'f32[10,128]{1,0:T(8,128)}', space=vmem, size = 0x2000, scoped, tag = 'scratch operand']
  %s0 = inlined_call_operand.vmem [shape: f32[2,16,128], index: 0, kind: input, shape index: {}, may-alias: {0,1,2}]
  %s1 = inlined_call_operand.vmem [shape: f32[2,16,128], index: 1, kind: input, shape index: {}, may-alias: {0,1,2}]
  %s2 = inlined_call_operand.vmem [shape: f32[2,16,128], index: 2, kind: input, shape index: {}, may-alias: {0,1,2}]
  %s3 = inlined_call_operand.vmem [shape: bf16[3,128,128], index: 3, kind: input, shape index: {}]
  %s4 = inlined_call_operand.vmem [shape: f32[1,128], index: 4, kind: input, shape index: {}]
  %s5 = inlined_call_operand.vmem [shape: f32[1,128], index: 5, kind: input, shape index: {}]
  %s6 = inlined_call_operand.vmem [shape: f32[2,16,128], index: 6, kind: output, shape index: {0}]
  %s7 = inlined_call_operand.vmem [shape: f32[4,2,128], index: 7, kind: output, shape index: {1}]
  %8 = xla_tuple %s6, %s7
  %s9 = sld [smem:[#allocation0]]
  $region65: #{basic_block_forward.4} parent=0
    _
  %s11 = ssub.s32 1, %s9
  %s12 = scalar_select 0, %s11, %s9
  loop: start=0, step=1, limit=6
  $region2: #{basic_block_forward.4} parent=0 // loop_pre_header
    _
  $region3: #{basic_block_forward.4} parent=0 // loop_header
    %s14 = sphi 0, %s18
    %p15 = scmp.ge.s32.totalorder %s14, 6
    %s21 = sphi 0, %s33
    %s22 = sphi 0, %s29
    %s23 = sphi 0, %s21
    %s24 = sphi 0, %s22
    %s25 = sphi 0, %s23
    %s26 = sphi 0, %s24
    %s38 = sphi 0, %s40
    %s41 = sphi 0, %s38
    %s42 = sphi 0, %s41
    %s58 = sphi 0, %s42
    %s72 = sphi 0, %s74
    %s75 = sphi 0, %s72
    %s76 = sphi 0, %s75
    %s92 = sphi 0, %s76
    %s106 = sphi 0, %s108
    %s109 = sphi 0, %s106
    %s110 = sphi 0, %s109
    %s126 = sphi 0, %s110
    %s130 = sphi 0, %s130
    %s132 = sphi 0, %s130
    %s133 = sphi 0, %s132
    %s147 = sphi 0, %s133
    %s151 = sphi 0, %s151
    %s153 = sphi 0, %s151
    %s154 = sphi 0, %s153
    %s168 = sphi 0, %s154
    %s172 = sphi 0, %s172
    %s174 = sphi 0, %s172
    %s175 = sphi 0, %s174
    %s189 = sphi 0, %s175
    %s197 = sphi 0, %s199
    %s200 = sphi 0, %s197
    %s201 = sphi 0, %s200
    %s217 = sphi 0, %s201
    %s227 = sphi 0, %s229
    %s230 = sphi 0, %s227
    %s231 = sphi 0, %s230
    %s247 = sphi 0, %s231
  $region4: #{basic_block_forward.4} parent=0 // loop_header_branch
    %17 = sbr.rel (%p15) target = $region8
  $region5: #{basic_block_forward.4} parent=0 // loop_body
    %s19 = ssub.s32 %s14, 1
    %s20 = ssub.s32 %s14, 2
    %s27 = sadd.s32 1, %s22
    %p28 = scmp.ge.s32.totalorder %s27, 2
    %s29 = scalar_select %p28, 0, %s27
    %s30 = sadd.s32 1, %s21
    %s31 = scalar_select %p28, %s30, %s21
    %p32 = scmp.ge.s32.totalorder %s31, 2
    %s33 = scalar_select %p32, 0, %s31
    %s34 = ssub.s32 %s21, %s33
    %s35 = ssub.s32 %s22, %s29
    %s36 = sor.u32 %s34, %s35
    %p37 = scmp.eq.s32.totalorder %s36, 0
    %s39 = sadd.s32 %s38, 1
    %s40 = scalar_select %p37, %s38, %s39
    %p43 = pneg %p37
    %p44 = scmp.eq.s32.totalorder %s14, 3
    %p45 = por %p43, %p44
    %p46 = scmp.ne.s32.totalorder %s38, %s41
    %p47 = scmp.eq.s32.totalorder %s14, 0
    %p48 = por %p46, %p47
    %p49 = scmp.ne.s32.totalorder %s38, %s41
    %p50 = scmp.eq.s32.totalorder %s19, 3
    %p51 = por %p49, %p50
    %p52 = scmp.ne.s32.totalorder %s41, %s42
    %p53 = scmp.eq.s32.totalorder %s19, 0
    %p54 = por %p52, %p53
    %p55 = scmp.ne.s32.totalorder %s41, %s42
    %p56 = scmp.eq.s32.totalorder %s20, 3
    %p57 = por %p55, %p56
    %p59 = scmp.ne.s32.totalorder %s42, %s58
    %p60 = scmp.eq.s32.totalorder %s20, 0
    %p61 = por %p59, %p60
    %s62 = ssub.s32 %s22, 1
    %p63 = scmp.gt.s32.totalorder %s62, 0
    %s64 = scalar_select %p63, %s62, 0
    %s65 = ssub.s32 %s29, 1
    %p66 = scmp.gt.s32.totalorder %s65, 0
    %s67 = scalar_select %p66, %s65, 0
    %s68 = ssub.s32 %s21, %s33
    %s69 = ssub.s32 %s64, %s67
    %s70 = sor.u32 %s68, %s69
    %p71 = scmp.eq.s32.totalorder %s70, 0
    %s73 = sadd.s32 %s72, 1
    %s74 = scalar_select %p71, %s72, %s73
    %p77 = pneg %p71
    %p78 = scmp.eq.s32.totalorder %s14, 3
    %p79 = por %p77, %p78
    %p80 = scmp.ne.s32.totalorder %s72, %s75
    %p81 = scmp.eq.s32.totalorder %s14, 0
    %p82 = por %p80, %p81
    %p83 = scmp.ne.s32.totalorder %s72, %s75
    %p84 = scmp.eq.s32.totalorder %s19, 3
    %p85 = por %p83, %p84
    %p86 = scmp.ne.s32.totalorder %s75, %s76
    %p87 = scmp.eq.s32.totalorder %s19, 0
    %p88 = por %p86, %p87
    %p89 = scmp.ne.s32.totalorder %s75, %s76
    %p90 = scmp.eq.s32.totalorder %s20, 3
    %p91 = por %p89, %p90
    %p93 = scmp.ne.s32.totalorder %s76, %s92
    %p94 = scmp.eq.s32.totalorder %s20, 0
    %p95 = por %p93, %p94
    %s96 = sadd.s32 %s22, 1
    %p97 = scmp.lt.s32.totalorder %s96, 1
    %s98 = scalar_select %p97, %s96, 1
    %s99 = sadd.s32 %s29, 1
    %p100 = scmp.lt.s32.totalorder %s99, 1
    %s101 = scalar_select %p100, %s99, 1
    %s102 = ssub.s32 %s21, %s33
    %s103 = ssub.s32 %s98, %s101
    %s104 = sor.u32 %s102, %s103
    %p105 = scmp.eq.s32.totalorder %s104, 0
    %s107 = sadd.s32 %s106, 1
    %s108 = scalar_select %p105, %s106, %s107
    %p111 = pneg %p105
    %p112 = scmp.eq.s32.totalorder %s14, 3
    %p113 = por %p111, %p112
    %p114 = scmp.ne.s32.totalorder %s106, %s109
    %p115 = scmp.eq.s32.totalorder %s14, 0
    %p116 = por %p114, %p115
    %p117 = scmp.ne.s32.totalorder %s106, %s109
    %p118 = scmp.eq.s32.totalorder %s19, 3
    %p119 = por %p117, %p118
    %p120 = scmp.ne.s32.totalorder %s109, %s110
    %p121 = scmp.eq.s32.totalorder %s19, 0
    %p122 = por %p120, %p121
    %p123 = scmp.ne.s32.totalorder %s109, %s110
    %p124 = scmp.eq.s32.totalorder %s20, 3
    %p125 = por %p123, %p124
    %p127 = scmp.ne.s32.totalorder %s110, %s126
    %p128 = scmp.eq.s32.totalorder %s20, 0
    %p129 = por %p127, %p128
    %s131 = sadd.s32 %s130, 1
    %p134 = scmp.eq.s32.totalorder %s14, 3
    %p135 = scmp.ne.s32.totalorder %s130, %s132
    %p136 = scmp.eq.s32.totalorder %s14, 0
    %p137 = por %p135, %p136
    %p138 = scmp.ne.s32.totalorder %s130, %s132
    %p139 = scmp.eq.s32.totalorder %s19, 3
    %p140 = por %p138, %p139
    %p141 = scmp.ne.s32.totalorder %s132, %s133
    %p142 = scmp.eq.s32.totalorder %s19, 0
    %p143 = por %p141, %p142
    %p144 = scmp.ne.s32.totalorder %s132, %s133
    %p145 = scmp.eq.s32.totalorder %s20, 3
    %p146 = por %p144, %p145
    %p148 = scmp.ne.s32.totalorder %s133, %s147
    %p149 = scmp.eq.s32.totalorder %s20, 0
    %p150 = por %p148, %p149
    %s152 = sadd.s32 %s151, 1
    %p155 = scmp.eq.s32.totalorder %s14, 3
    %p156 = scmp.ne.s32.totalorder %s151, %s153
    %p157 = scmp.eq.s32.totalorder %s14, 0
    %p158 = por %p156, %p157
    %p159 = scmp.ne.s32.totalorder %s151, %s153
    %p160 = scmp.eq.s32.totalorder %s19, 3
    %p161 = por %p159, %p160
    %p162 = scmp.ne.s32.totalorder %s153, %s154
    %p163 = scmp.eq.s32.totalorder %s19, 0
    %p164 = por %p162, %p163
    %p165 = scmp.ne.s32.totalorder %s153, %s154
    %p166 = scmp.eq.s32.totalorder %s20, 3
    %p167 = por %p165, %p166
    %p169 = scmp.ne.s32.totalorder %s154, %s168
    %p170 = scmp.eq.s32.totalorder %s20, 0
    %p171 = por %p169, %p170
    %s173 = sadd.s32 %s172, 1
    %p176 = scmp.eq.s32.totalorder %s14, 3
    %p177 = scmp.ne.s32.totalorder %s172, %s174
    %p178 = scmp.eq.s32.totalorder %s14, 0
    %p179 = por %p177, %p178
    %p180 = scmp.ne.s32.totalorder %s172, %s174
    %p181 = scmp.eq.s32.totalorder %s19, 3
    %p182 = por %p180, %p181
    %p183 = scmp.ne.s32.totalorder %s174, %s175
    %p184 = scmp.eq.s32.totalorder %s19, 0
    %p185 = por %p183, %p184
    %p186 = scmp.ne.s32.totalorder %s174, %s175
    %p187 = scmp.eq.s32.totalorder %s20, 3
    %p188 = por %p186, %p187
    %p190 = scmp.ne.s32.totalorder %s175, %s189
    %p191 = scmp.eq.s32.totalorder %s20, 0
    %p192 = por %p190, %p191
    %s193 = ssub.s32 %s21, %s33
    %s194 = ssub.s32 %s22, %s29
    %s195 = sor.u32 %s193, %s194
    %p196 = scmp.eq.s32.totalorder %s195, 0
    %s198 = sadd.s32 %s197, 1
    %s199 = scalar_select %p196, %s197, %s198
    %p202 = pneg %p196
    %p203 = scmp.eq.s32.totalorder %s14, 3
    %p204 = por %p202, %p203
    %p205 = scmp.ne.s32.totalorder %s197, %s200
    %p206 = scmp.eq.s32.totalorder %s14, 0
    %p207 = por %p205, %p206
    %p208 = scmp.ne.s32.totalorder %s197, %s200
    %p209 = scmp.eq.s32.totalorder %s19, 3
    %p210 = por %p208, %p209
    %p211 = scmp.ne.s32.totalorder %s200, %s201
    %p212 = scmp.eq.s32.totalorder %s19, 0
    %p213 = por %p211, %p212
    %p214 = scmp.ne.s32.totalorder %s200, %s201
    %p215 = scmp.eq.s32.totalorder %s20, 3
    %p216 = por %p214, %p215
    %p218 = scmp.ne.s32.totalorder %s201, %s217
    %p219 = scmp.eq.s32.totalorder %s20, 0
    %p220 = por %p218, %p219
    %s221 = smul.u32 %s21, 2
    %s222 = sadd.s32 %s221, %s22
    %s223 = smul.u32 %s33, 2
    %s224 = sadd.s32 %s223, %s29
    %s225 = ssub.s32 %s222, %s224
    %p226 = scmp.eq.s32.totalorder %s225, 0
    %s228 = sadd.s32 %s227, 1
    %s229 = scalar_select %p226, %s227, %s228
    %p232 = pneg %p226
    %p233 = scmp.eq.s32.totalorder %s14, 3
    %p234 = por %p232, %p233
    %p235 = scmp.ne.s32.totalorder %s227, %s230
    %p236 = scmp.eq.s32.totalorder %s14, 0
    %p237 = por %p235, %p236
    %p238 = scmp.ne.s32.totalorder %s227, %s230
    %p239 = scmp.eq.s32.totalorder %s19, 3
    %p240 = por %p238, %p239
    %p241 = scmp.ne.s32.totalorder %s230, %s231
    %p242 = scmp.eq.s32.totalorder %s19, 0
    %p243 = por %p241, %p242
    %p244 = scmp.ne.s32.totalorder %s230, %s231
    %p245 = scmp.eq.s32.totalorder %s20, 3
    %p246 = por %p244, %p245
    %p248 = scmp.ne.s32.totalorder %s231, %s247
    %p249 = scmp.eq.s32.totalorder %s20, 0
    %p250 = por %p248, %p249
    %p251 = scmp.le.s32.totalorder 1, %s14
    %p252 = scmp.lt.s32.totalorder %s14, 5
    %p253 = pnand %p251, %p252
    %p254 = pneg %p253
    // Predicated region
    $region9: #{basic_block_forward.4} parent=5 // pred_check
      _
    $region10: #{basic_block_forward.4} parent=5 // pred_check_branch
      %256 = sbr.rel (%p253) target = $region12
    $region11: #{basic_block_forward.4} parent=5 // pred_region
      %s257 = ssub.s32 %s14, 1
      // Predicated region
      $region13: #{basic_block_forward.4} parent=11 // pred_check
        %p258 = pneg %p143
      $region14: #{basic_block_forward.4} parent=11 // pred_check_branch
        %260 = sbr.rel (%p258) target = $region16
      $region15: #{basic_block_forward.4} parent=11 // pred_region
        _
      $region16: #{basic_block_forward.4} parent=11 // pred_fallthru
        _
      // Predicated region
      $region17: #{basic_block_forward.4} parent=11 // pred_check
        %p261 = pneg %p164
      $region18: #{basic_block_forward.4} parent=11 // pred_check_branch
        %263 = sbr.rel (%p261) target = $region20
      $region19: #{basic_block_forward.4} parent=11 // pred_region
        _
      $region20: #{basic_block_forward.4} parent=11 // pred_fallthru
        _
      // Predicated region
      $region21: #{basic_block_forward.4} parent=11 // pred_check
        %p264 = pneg %p185
      $region22: #{basic_block_forward.4} parent=11 // pred_check_branch
        %266 = sbr.rel (%p264) target = $region24
      $region23: #{basic_block_forward.4} parent=11 // pred_region
        _
      $region24: #{basic_block_forward.4} parent=11 // pred_fallthru
        _
    $region12: #{basic_block_forward.4} parent=5 // pred_fallthru
      _
    %p267 = scmp.lt.s32.totalorder %s14, 4
    // Predicated region
    $region25: #{basic_block_forward.4} parent=5 // pred_check
      %p268 = pneg %p267
    $region26: #{basic_block_forward.4} parent=5 // pred_check_branch
      %270 = sbr.rel (%p268) target = $region28
    $region27: #{basic_block_forward.4} parent=5 // pred_region
      // Predicated region
      $region29: #{basic_block_forward.4} parent=27 // pred_check
        %p271 = pneg %p48
      $region30: #{basic_block_forward.4} parent=27 // pred_check_branch
        %273 = sbr.rel (%p271) target = $region32
      $region31: #{basic_block_forward.4} parent=27 // pred_region
        %p274 = scmp.lt.s32.totalorder %s21, 1
        %s275 = scalar_select %p274, %s21, 1
        %p276 = scmp.lt.s32.totalorder %s22, 1
        %s277 = scalar_select %p276, %s22, 1
        %s278 = smul.addr %s275, 2
        %s279 = sadd.s32 %s277, %s278
        %s280 = smul.addr %s279, 8
        %s281 = scalar_lea.vmem %s0, %s280
      $region32: #{basic_block_forward.4} parent=27 // pred_fallthru
        _
      // Predicated region
      $region33: #{basic_block_forward.4} parent=27 // pred_check
        %p282 = pneg %p82
      $region34: #{basic_block_forward.4} parent=27 // pred_check_branch
        %284 = sbr.rel (%p282) target = $region36
      $region35: #{basic_block_forward.4} parent=27 // pred_region
        %s285 = ssub.s32 %s22, 1
        %p286 = scmp.gt.s32.totalorder %s285, 0
        %s287 = scalar_select %p286, %s285, 0
        %p288 = scmp.lt.s32.totalorder %s21, 1
        %s289 = scalar_select %p288, %s21, 1
        %p290 = scmp.lt.s32.totalorder %s287, 1
        %s291 = scalar_select %p290, %s287, 1
        %s292 = smul.addr %s289, 2
        %s293 = sadd.s32 %s291, %s292
        %s294 = smul.addr %s293, 8
        %s295 = scalar_lea.vmem %s1, %s294
        %s296 = ssub.s32 %s22, 1
        %p297 = scmp.gt.s32.totalorder %s296, 0
        %s298 = scalar_select %p297, %s296, 0
      $region36: #{basic_block_forward.4} parent=27 // pred_fallthru
        _
      // Predicated region
      $region37: #{basic_block_forward.4} parent=27 // pred_check
        %p299 = pneg %p116
      $region38: #{basic_block_forward.4} parent=27 // pred_check_branch
        %301 = sbr.rel (%p299) target = $region40
      $region39: #{basic_block_forward.4} parent=27 // pred_region
        %s302 = sadd.s32 %s22, 1
        %p303 = scmp.lt.s32.totalorder %s302, 1
        %s304 = scalar_select %p303, %s302, 1
        %p305 = scmp.lt.s32.totalorder %s21, 1
        %s306 = scalar_select %p305, %s21, 1
        %p307 = scmp.lt.s32.totalorder %s304, 1
        %s308 = scalar_select %p307, %s304, 1
        %s309 = smul.addr %s306, 2
        %s310 = sadd.s32 %s308, %s309
        %s311 = smul.addr %s310, 8
        %s312 = scalar_lea.vmem %s2, %s311
        %s313 = sadd.s32 %s22, 1
        %p314 = scmp.lt.s32.totalorder %s313, 1
        %s315 = scalar_select %p314, %s313, 1
      $region40: #{basic_block_forward.4} parent=27 // pred_fallthru
        _
    $region28: #{basic_block_forward.4} parent=5 // pred_fallthru
      _
    %p316 = scmp.le.s32.totalorder 1, %s14
    %p317 = scmp.lt.s32.totalorder %s14, 5
    %p318 = pnand %p316, %p317
    %p319 = pneg %p318
    // Predicated region
    $region41: #{basic_block_forward.4} parent=5 // pred_check
      _
    $region42: #{basic_block_forward.4} parent=5 // pred_check_branch
      %321 = sbr.rel (%p318) target = $region44
    $region43: #{basic_block_forward.4} parent=5 // pred_region
      %s322 = ssub.s32 %s14, 1
      %p323 = scmp.lt.s32.totalorder %s23, 1
      %s324 = scalar_select %p323, %s23, 1
      %p325 = scmp.lt.s32.totalorder %s24, 1
      %s326 = scalar_select %p325, %s24, 1
      %s327 = smul.addr %s324, 2
      %s328 = sadd.s32 %s326, %s327
      %s329 = smul.addr %s328, 8
      %s330 = scalar_lea.vmem %s0, %s329
      %p331 = pneg %p54
      %p332 = pneg %p51
      %s333 = ssub.s32 %s24, 1
      %p334 = scmp.gt.s32.totalorder %s333, 0
      %s335 = scalar_select %p334, %s333, 0
      %p336 = scmp.lt.s32.totalorder %s23, 1
      %s337 = scalar_select %p336, %s23, 1
      %p338 = scmp.lt.s32.totalorder %s335, 1
      %s339 = scalar_select %p338, %s335, 1
      %s340 = smul.addr %s337, 2
      %s341 = sadd.s32 %s339, %s340
      %s342 = smul.addr %s341, 8
      %s343 = scalar_lea.vmem %s1, %s342
      %p344 = pneg %p88
      %p345 = pneg %p85
      %s346 = sadd.s32 %s24, 1
      %p347 = scmp.lt.s32.totalorder %s346, 1
      %s348 = scalar_select %p347, %s346, 1
      %p349 = scmp.lt.s32.totalorder %s23, 1
      %s350 = scalar_select %p349, %s23, 1
      %p351 = scmp.lt.s32.totalorder %s348, 1
      %s352 = scalar_select %p351, %s348, 1
      %s353 = smul.addr %s350, 2
      %s354 = sadd.s32 %s352, %s353
      %s355 = smul.addr %s354, 8
      %s356 = scalar_lea.vmem %s2, %s355
      %p357 = pneg %p122
      %p358 = pneg %p119
      %p359 = pneg %p143
      %p360 = pneg %p140
      %p361 = pneg %p164
      %p362 = pneg %p161
      %p363 = pneg %p185
      %p364 = pneg %p182
      %p365 = pneg %p213
      %p366 = pneg %p210
      %p367 = scmp.lt.s32.totalorder %s23, 1
      %s368 = scalar_select %p367, %s23, 1
      %p369 = scmp.lt.s32.totalorder %s24, 1
      %s370 = scalar_select %p369, %s24, 1
      %s371 = smul.addr %s368, 2
      %s372 = sadd.s32 %s370, %s371
      %s373 = smul.addr %s372, 8
      %s374 = scalar_lea.vmem %s6, %s373
      %p375 = pneg %p243
      %p376 = pneg %p240
      %s377 = smul.u32 %s23, 2
      %s378 = sadd.s32 %s377, %s24
      %p379 = scmp.lt.s32.totalorder %s378, 3
      %s380 = scalar_select %p379, %s378, 3
      %s381 = smul.addr %s380, 2
      %s382 = scalar_lea.vmem %s7, %s381
      %p383 = scmp.lt.s32.totalorder %s23, 1
      %s384 = scalar_select %p383, %s23, 1
      %p385 = scmp.lt.s32.totalorder %s24, 1
      %s386 = scalar_select %p385, %s24, 1
      %s387 = smul.addr %s384, 2
      %s388 = sadd.s32 %s386, %s387
      %s389 = smul.addr %s388, 8
      %s390 = scalar_lea.vmem %s0, %s389
      %s391 = ssub.s32 %s24, 1
      %p392 = scmp.gt.s32.totalorder %s391, 0
      %s393 = scalar_select %p392, %s391, 0
      %p394 = scmp.lt.s32.totalorder %s23, 1
      %s395 = scalar_select %p394, %s23, 1
      %p396 = scmp.lt.s32.totalorder %s393, 1
      %s397 = scalar_select %p396, %s393, 1
      %s398 = smul.addr %s395, 2
      %s399 = sadd.s32 %s397, %s398
      %s400 = smul.addr %s399, 8
      %s401 = scalar_lea.vmem %s1, %s400
      %s402 = ssub.s32 %s24, 1
      %p403 = scmp.gt.s32.totalorder %s402, 0
      %s404 = scalar_select %p403, %s402, 0
      %s405 = sadd.s32 %s24, 1
      %p406 = scmp.lt.s32.totalorder %s405, 1
      %s407 = scalar_select %p406, %s405, 1
      %p408 = scmp.lt.s32.totalorder %s23, 1
      %s409 = scalar_select %p408, %s23, 1
      %p410 = scmp.lt.s32.totalorder %s407, 1
      %s411 = scalar_select %p410, %s407, 1
      %s412 = smul.addr %s409, 2
      %s413 = sadd.s32 %s411, %s412
      %s414 = smul.addr %s413, 8
      %s415 = scalar_lea.vmem %s2, %s414
      %s416 = sadd.s32 %s24, 1
      %p417 = scmp.lt.s32.totalorder %s416, 1
      %s418 = scalar_select %p417, %s416, 1
      %p419 = scmp.lt.s32.totalorder %s23, 1
      %s420 = scalar_select %p419, %s23, 1
      %p421 = scmp.lt.s32.totalorder %s24, 1
      %s422 = scalar_select %p421, %s24, 1
      %s423 = smul.addr %s420, 2
      %s424 = sadd.s32 %s422, %s423
      %s425 = smul.addr %s424, 8
      %s426 = scalar_lea.vmem %s6, %s425
      %s427 = smul.u32 %s23, 2
      %s428 = sadd.s32 %s427, %s24
      %p429 = scmp.lt.s32.totalorder %s428, 3
      %s430 = scalar_select %p429, %s428, 3
      %s431 = smul.addr %s430, 2
      %s432 = scalar_lea.vmem %s7, %s431
      %s433 = smul.u32 %s23, 2
      %s434 = sadd.s32 %s433, %s24
      %v436 = vld [vmem:[%s390] sm:$0xff]
      %v437 = vld [vmem:[%s4] sm:$0x1]
      %v439 = vlaneseq
      %v440 = vshrl.u32 %v439, 7
      %v441 = vsub.s32 0, %v440
      %v442 = vrot.slane %v437, %v441
      %v444 = vmul.f32 %v436, %v442
      %v445 = vld [vmem:[%s5] sm:$0x1]
      %v447 = vlaneseq
      %v448 = vshrl.u32 %v447, 7
      %v449 = vsub.s32 0, %v448
      %v450 = vrot.slane %v445, %v449
      %v452 = vadd.f32 %v444, %v450
      %v453 = vmax.f32 %v452, 0.0
      %454 = vst [vmem:[#allocation2 + $0x1] sm:$0xff] %v453
      %p455 = scmp.eq.s32.totalorder %s24, 0
      %v456 = vld [vmem:[%s401 + $0x7] sm:$0x1]
      %v457 = vld [vmem:[%s4] sm:$0x1]
      %v458 = vmul.f32 %v456, %v457
      %v459 = vld [vmem:[%s5] sm:$0x1]
      %v460 = vadd.f32 %v458, %v459
      %v461 = vmax.f32 %v460, 0.0
      %s462 = scalar_select %p455, 1, 0
      %v463 = vstv %s462
      %vm464 = vcmp.eq.s32.totalorder %v463, 1
      %v465 = vsel %vm464, 0.0, %v461
      %466 = vst [vmem:[#allocation2] sm:$0x1] %v465
      %p467 = scmp.eq.s32.totalorder %s24, 1
      %v468 = vld [vmem:[%s415] sm:$0x1]
      %v469 = vld [vmem:[%s4] sm:$0x1]
      %v470 = vmul.f32 %v468, %v469
      %v471 = vld [vmem:[%s5] sm:$0x1]
      %v472 = vadd.f32 %v470, %v471
      %v473 = vmax.f32 %v472, 0.0
      %s474 = scalar_select %p467, 1, 0
      %v475 = vstv %s474
      %vm476 = vcmp.eq.s32.totalorder %v475, 1
      %v477 = vsel %vm476, 0.0, %v473
      %478 = vst [vmem:[#allocation2 + $0x9] sm:$0x1] %v477
      %v479 = vld [vmem:[#allocation2] sm:$0xff]
      %v480 = vld [vmem:[#allocation2 + $0x8] sm:$0x3]
      %v481 = vpack.c.bf16 %v480, %v479
      %v482 = vld [vmem:[%s3] sm:$0xf]
      %v483 = vld [vmem:[%s3 + $0x4] sm:$0xf]
      %v484 = vld [vmem:[%s3 + $0x8] sm:$0xf]
      %v485 = vld [vmem:[%s3 + $0xc] sm:$0xf]
      %v486 = vld [vmem:[%s3 + $0x10] sm:$0xf]
      %v487 = vld [vmem:[%s3 + $0x14] sm:$0xf]
      %v488 = vld [vmem:[%s3 + $0x18] sm:$0xf]
      %v489 = vld [vmem:[%s3 + $0x1c] sm:$0xf]
      %v490 = vld [vmem:[%s3 + $0x20] sm:$0xf]
      %v491 = vld [vmem:[%s3 + $0x24] sm:$0xf]
      %v492 = vld [vmem:[%s3 + $0x28] sm:$0xf]
      %v493 = vld [vmem:[%s3 + $0x2c] sm:$0xf]
      %v494 = vld [vmem:[%s3 + $0x30] sm:$0xf]
      %v495 = vld [vmem:[%s3 + $0x34] sm:$0xf]
      %v496 = vld [vmem:[%s3 + $0x38] sm:$0xf]
      %v497 = vld [vmem:[%s3 + $0x3c] sm:$0xf]
      %s498 = scalar_lea.vmem %s3, 64
      %v499 = vld [vmem:[%s498] sm:$0xf]
      %v500 = vld [vmem:[%s498 + $0x4] sm:$0xf]
      %v501 = vld [vmem:[%s498 + $0x8] sm:$0xf]
      %v502 = vld [vmem:[%s498 + $0xc] sm:$0xf]
      %v503 = vld [vmem:[%s498 + $0x10] sm:$0xf]
      %v504 = vld [vmem:[%s498 + $0x14] sm:$0xf]
      %v505 = vld [vmem:[%s498 + $0x18] sm:$0xf]
      %v506 = vld [vmem:[%s498 + $0x1c] sm:$0xf]
      %v507 = vld [vmem:[%s498 + $0x20] sm:$0xf]
      %v508 = vld [vmem:[%s498 + $0x24] sm:$0xf]
      %v509 = vld [vmem:[%s498 + $0x28] sm:$0xf]
      %v510 = vld [vmem:[%s498 + $0x2c] sm:$0xf]
      %v511 = vld [vmem:[%s498 + $0x30] sm:$0xf]
      %v512 = vld [vmem:[%s498 + $0x34] sm:$0xf]
      %v513 = vld [vmem:[%s498 + $0x38] sm:$0xf]
      %v514 = vld [vmem:[%s498 + $0x3c] sm:$0xf]
      %v516 = vshrl.u32 %v481, 16
      %v518 = vshll.u32 %v481, 16
      %v520 = vrot.slane %v518, 1
      %v521 = vor.u32 %v516, %v520
      %v539 = vunpack.c.l.b16 %v499
      %v540 = vunpack.c.l.b16 %v500
      %v541 = vunpack.c.l.b16 %v501
      %v542 = vunpack.c.l.b16 %v502
      %v543 = vunpack.c.l.b16 %v503
      %v544 = vunpack.c.l.b16 %v504
      %v545 = vunpack.c.l.b16 %v505
      %v546 = vunpack.c.l.b16 %v506
      %v547 = vunpack.c.l.b16 %v507
      %v548 = vunpack.c.l.b16 %v508
      %v549 = vunpack.c.l.b16 %v509
      %v550 = vunpack.c.l.b16 %v510
      %v551 = vunpack.c.l.b16 %v511
      %v552 = vunpack.c.l.b16 %v512
      %v553 = vunpack.c.l.b16 %v513
      %v554 = vunpack.c.l.b16 %v514
      %v555 = vpack.c.b16 %v540, %v539
      %v556 = vpack.c.b16 %v542, %v541
      %v557 = vpack.c.b16 %v544, %v543
      %v558 = vpack.c.b16 %v546, %v545
      %v559 = vpack.c.b16 %v548, %v547
      %v560 = vpack.c.b16 %v550, %v549
      %v561 = vpack.c.b16 %v552, %v551
      %v562 = vpack.c.b16 %v554, %v553
      %571 = vmatprep.subr.bf16.mxu0 0
      %572 = vmatpush1.bf16.msra.mxu0 %v562
      %573 = vmatprep.subr.bf16.mxu0 0
      %574 = vmatpush1.bf16.msra.mxu0 %v561
      %575 = vmatprep.subr.bf16.mxu0 0
      %576 = vmatpush1.bf16.msra.mxu0 %v560
      %577 = vmatprep.subr.bf16.mxu0 0
      %578 = vmatpush1.bf16.msra.mxu0 %v559
      %579 = vmatprep.subr.bf16.mxu0 0
      %580 = vmatpush1.bf16.msra.mxu0 %v558
      %581 = vmatprep.subr.bf16.mxu0 0
      %582 = vmatpush1.bf16.msra.mxu0 %v557
      %583 = vmatprep.subr.bf16.mxu0 0
      %584 = vmatpush1.bf16.msra.mxu0 %v556
      %585 = vmatprep.subr.bf16.mxu0 0
      %586 = vmatpush1.bf16.msra.mxu0 %v555
      %587 = vmatprep.subr.bf16.mxu0 0
      %588 = vmatpush2.bf16.msra.mxu0 0
      %589 = vmatprep.subr.bf16.mxu0 0
      %590 = vmatpush2.bf16.msra.mxu0 0
      %591 = vmatprep.subr.bf16.mxu0 0
      %592 = vmatpush2.bf16.msra.mxu0 0
      %593 = vmatprep.subr.bf16.mxu0 0
      %594 = vmatpush2.bf16.msra.mxu0 0
      %595 = vmatprep.subr.bf16.mxu0 0
      %596 = vmatpush2.bf16.msra.mxu0 0
      %597 = vmatprep.subr.bf16.mxu0 0
      %598 = vmatpush2.bf16.msra.mxu0 0
      %599 = vmatprep.subr.bf16.mxu0 0
      %600 = vmatpush2.bf16.msra.mxu0 0
      %601 = vmatprep.subr.bf16.mxu0 0
      %602 = vmatpush2.bf16.msra.mxu0 0
      %603 = vmatprep.mubr.bf16.mxu0 0
      %604 = vmatmul.mubr.bf16.gmra.mxu0 %v521
      %v605 = vpop.f32.mrf.mxu0
      %v606 = vadd.f32 0.0, %v605
      %v607 = vpop.f32.mrf.mxu0
      %v608 = vpop.f32.mrf.mxu0
      %v609 = vpop.f32.mrf.mxu0
      %610 = vdwg.mxu0
      %v627 = vunpack.c.l.b16 %v482
      %v628 = vunpack.c.l.b16 %v483
      %v629 = vunpack.c.l.b16 %v484
      %v630 = vunpack.c.l.b16 %v485
      %v631 = vunpack.c.l.b16 %v486
      %v632 = vunpack.c.l.b16 %v487
      %v633 = vunpack.c.l.b16 %v488
      %v634 = vunpack.c.l.b16 %v489
      %v635 = vunpack.c.l.b16 %v490
      %v636 = vunpack.c.l.b16 %v491
      %v637 = vunpack.c.l.b16 %v492
      %v638 = vunpack.c.l.b16 %v493
      %v639 = vunpack.c.l.b16 %v494
      %v640 = vunpack.c.l.b16 %v495
      %v641 = vunpack.c.l.b16 %v496
      %v642 = vunpack.c.l.b16 %v497
      %v643 = vpack.c.b16 %v628, %v627
      %v644 = vpack.c.b16 %v630, %v629
      %v645 = vpack.c.b16 %v632, %v631
      %v646 = vpack.c.b16 %v634, %v633
      %v647 = vpack.c.b16 %v636, %v635
      %v648 = vpack.c.b16 %v638, %v637
      %v649 = vpack.c.b16 %v640, %v639
      %v650 = vpack.c.b16 %v642, %v641
      %659 = vmatprep.subr.bf16.mxu0 0
      %660 = vmatpush1.bf16.msra.mxu0 %v650
      %661 = vmatprep.subr.bf16.mxu0 0
      %662 = vmatpush1.bf16.msra.mxu0 %v649
      %663 = vmatprep.subr.bf16.mxu0 0
      %664 = vmatpush1.bf16.msra.mxu0 %v648
      %665 = vmatprep.subr.bf16.mxu0 0
      %666 = vmatpush1.bf16.msra.mxu0 %v647
      %667 = vmatprep.subr.bf16.mxu0 0
      %668 = vmatpush1.bf16.msra.mxu0 %v646
      %669 = vmatprep.subr.bf16.mxu0 0
      %670 = vmatpush1.bf16.msra.mxu0 %v645
      %671 = vmatprep.subr.bf16.mxu0 0
      %672 = vmatpush1.bf16.msra.mxu0 %v644
      %673 = vmatprep.subr.bf16.mxu0 0
      %674 = vmatpush1.bf16.msra.mxu0 %v643
      %675 = vmatprep.subr.bf16.mxu0 0
      %676 = vmatpush2.bf16.msra.mxu0 0
      %677 = vmatprep.subr.bf16.mxu0 0
      %678 = vmatpush2.bf16.msra.mxu0 0
      %679 = vmatprep.subr.bf16.mxu0 0
      %680 = vmatpush2.bf16.msra.mxu0 0
      %681 = vmatprep.subr.bf16.mxu0 0
      %682 = vmatpush2.bf16.msra.mxu0 0
      %683 = vmatprep.subr.bf16.mxu0 0
      %684 = vmatpush2.bf16.msra.mxu0 0
      %685 = vmatprep.subr.bf16.mxu0 0
      %686 = vmatpush2.bf16.msra.mxu0 0
      %687 = vmatprep.subr.bf16.mxu0 0
      %688 = vmatpush2.bf16.msra.mxu0 0
      %689 = vmatprep.subr.bf16.mxu0 0
      %690 = vmatpush2.bf16.msra.mxu0 0
      %691 = vmatprep.mubr.bf16.mxu0 0
      %692 = vmatmul.mubr.bf16.gmra.mxu0 %v481
      %v693 = vpop.f32.mrf.mxu0
      %v694 = vadd.f32 %v606, %v693
      %v695 = vpop.f32.mrf.mxu0
      %v696 = vpop.f32.mrf.mxu0
      %v697 = vpop.f32.mrf.mxu0
      %698 = vdwg.mxu0
      %s699 = scalar_lea.vmem %s3, 128
      %v700 = vld [vmem:[%s699] sm:$0xf]
      %v701 = vld [vmem:[%s699 + $0x4] sm:$0xf]
      %v702 = vld [vmem:[%s699 + $0x8] sm:$0xf]
      %v703 = vld [vmem:[%s699 + $0xc] sm:$0xf]
      %v704 = vld [vmem:[%s699 + $0x10] sm:$0xf]
      %v705 = vld [vmem:[%s699 + $0x14] sm:$0xf]
      %v706 = vld [vmem:[%s699 + $0x18] sm:$0xf]
      %v707 = vld [vmem:[%s699 + $0x1c] sm:$0xf]
      %v708 = vld [vmem:[%s699 + $0x20] sm:$0xf]
      %v709 = vld [vmem:[%s699 + $0x24] sm:$0xf]
      %v710 = vld [vmem:[%s699 + $0x28] sm:$0xf]
      %v711 = vld [vmem:[%s699 + $0x2c] sm:$0xf]
      %v712 = vld [vmem:[%s699 + $0x30] sm:$0xf]
      %v713 = vld [vmem:[%s699 + $0x34] sm:$0xf]
      %v714 = vld [vmem:[%s699 + $0x38] sm:$0xf]
      %v715 = vld [vmem:[%s699 + $0x3c] sm:$0xf]
      %v717 = vrot.slane %v481, 1
      %v735 = vunpack.c.l.b16 %v700
      %v736 = vunpack.c.l.b16 %v701
      %v737 = vunpack.c.l.b16 %v702
      %v738 = vunpack.c.l.b16 %v703
      %v739 = vunpack.c.l.b16 %v704
      %v740 = vunpack.c.l.b16 %v705
      %v741 = vunpack.c.l.b16 %v706
      %v742 = vunpack.c.l.b16 %v707
      %v743 = vunpack.c.l.b16 %v708
      %v744 = vunpack.c.l.b16 %v709
      %v745 = vunpack.c.l.b16 %v710
      %v746 = vunpack.c.l.b16 %v711
      %v747 = vunpack.c.l.b16 %v712
      %v748 = vunpack.c.l.b16 %v713
      %v749 = vunpack.c.l.b16 %v714
      %v750 = vunpack.c.l.b16 %v715
      %v751 = vpack.c.b16 %v736, %v735
      %v752 = vpack.c.b16 %v738, %v737
      %v753 = vpack.c.b16 %v740, %v739
      %v754 = vpack.c.b16 %v742, %v741
      %v755 = vpack.c.b16 %v744, %v743
      %v756 = vpack.c.b16 %v746, %v745
      %v757 = vpack.c.b16 %v748, %v747
      %v758 = vpack.c.b16 %v750, %v749
      %767 = vmatprep.subr.bf16.mxu0 0
      %768 = vmatpush1.bf16.msra.mxu0 %v758
      %769 = vmatprep.subr.bf16.mxu0 0
      %770 = vmatpush1.bf16.msra.mxu0 %v757
      %771 = vmatprep.subr.bf16.mxu0 0
      %772 = vmatpush1.bf16.msra.mxu0 %v756
      %773 = vmatprep.subr.bf16.mxu0 0
      %774 = vmatpush1.bf16.msra.mxu0 %v755
      %775 = vmatprep.subr.bf16.mxu0 0
      %776 = vmatpush1.bf16.msra.mxu0 %v754
      %777 = vmatprep.subr.bf16.mxu0 0
      %778 = vmatpush1.bf16.msra.mxu0 %v753
      %779 = vmatprep.subr.bf16.mxu0 0
      %780 = vmatpush1.bf16.msra.mxu0 %v752
      %781 = vmatprep.subr.bf16.mxu0 0
      %782 = vmatpush1.bf16.msra.mxu0 %v751
      %783 = vmatprep.subr.bf16.mxu0 0
      %784 = vmatpush2.bf16.msra.mxu0 0
      %785 = vmatprep.subr.bf16.mxu0 0
      %786 = vmatpush2.bf16.msra.mxu0 0
      %787 = vmatprep.subr.bf16.mxu0 0
      %788 = vmatpush2.bf16.msra.mxu0 0
      %789 = vmatprep.subr.bf16.mxu0 0
      %790 = vmatpush2.bf16.msra.mxu0 0
      %791 = vmatprep.subr.bf16.mxu0 0
      %792 = vmatpush2.bf16.msra.mxu0 0
      %793 = vmatprep.subr.bf16.mxu0 0
      %794 = vmatpush2.bf16.msra.mxu0 0
      %795 = vmatprep.subr.bf16.mxu0 0
      %796 = vmatpush2.bf16.msra.mxu0 0
      %797 = vmatprep.subr.bf16.mxu0 0
      %798 = vmatpush2.bf16.msra.mxu0 0
      %799 = vmatprep.mubr.bf16.mxu0 0
      %800 = vmatmul.mubr.bf16.gmra.mxu0 %v717
      %v801 = vpop.f32.mrf.mxu0
      %v802 = vadd.f32 0.0, %v801
      %v803 = vpop.f32.mrf.mxu0
      %v804 = vpop.f32.mrf.mxu0
      %v805 = vpop.f32.mrf.mxu0
      %806 = vdwg.mxu0
      %v807 = vadd.f32 %v694, %v802
      %v808 = vrot.slane %v807, 4
      %v809 = vadd.f32 %v807, %v808
      %v810 = vrot.slane %v809, 2
      %v811 = vadd.f32 %v809, %v810
      %v812 = vrot.slane %v811, 1
      %v813 = vadd.f32 %v811, %v812
      %814 = vst [vmem:[%s432] sm:$0x1] %v813
      %v815 = vmul.f32 %v807, %v807
      %v816 = vrot.slane %v815, 4
      %v817 = vadd.f32 %v815, %v816
      %v818 = vrot.slane %v817, 2
      %v819 = vadd.f32 %v817, %v818
      %v820 = vrot.slane %v819, 1
      %v821 = vadd.f32 %v819, %v820
      %822 = vst [vmem:[%s432 + $0x1] sm:$0x1] %v821
      %823 = vst [vmem:[%s426] sm:$0xff] %v807
      %p824 = scmp.lt.s32.totalorder %s23, 1
      %s825 = scalar_select %p824, %s23, 1
      %p826 = scmp.lt.s32.totalorder %s24, 1
      %s827 = scalar_select %p826, %s24, 1
      %s828 = smul.addr %s825, 2
      %s829 = sadd.s32 %s827, %s828
      %s830 = smul.addr %s829, 8
      %s831 = scalar_lea.vmem %s6, %s830
      %s832 = smul.u32 %s23, 2
      %s833 = sadd.s32 %s832, %s24
      %p834 = scmp.lt.s32.totalorder %s833, 3
      %s835 = scalar_select %p834, %s833, 3
      %s836 = smul.addr %s835, 2
      %s837 = scalar_lea.vmem %s7, %s836
      // Predicated region
      $region45: #{basic_block_forward.4} parent=43 // pred_check
        %p838 = pneg %p210
      $region46: #{basic_block_forward.4} parent=43 // pred_check_branch
        %840 = sbr.rel (%p838) target = $region48
      $region47: #{basic_block_forward.4} parent=43 // pred_region
        _
      $region48: #{basic_block_forward.4} parent=43 // pred_fallthru
        _
      // Predicated region
      $region49: #{basic_block_forward.4} parent=43 // pred_check
        %p841 = pneg %p240
      $region50: #{basic_block_forward.4} parent=43 // pred_check_branch
        %843 = sbr.rel (%p841) target = $region52
      $region51: #{basic_block_forward.4} parent=43 // pred_region
        %s844 = smul.u32 %s23, 2
        %s845 = sadd.s32 %s844, %s24
      $region52: #{basic_block_forward.4} parent=43 // pred_fallthru
        _
    $region44: #{basic_block_forward.4} parent=5 // pred_fallthru
      _
    %p846 = scmp.le.s32.totalorder 2, %s14
    // Predicated region
    $region53: #{basic_block_forward.4} parent=5 // pred_check
      %p847 = pneg %p846
    $region54: #{basic_block_forward.4} parent=5 // pred_check_branch
      %849 = sbr.rel (%p847) target = $region56
    $region55: #{basic_block_forward.4} parent=5 // pred_region
      %s850 = ssub.s32 %s14, 2
      // Predicated region
      $region57: #{basic_block_forward.4} parent=55 // pred_check
        %p851 = pneg %p216
      $region58: #{basic_block_forward.4} parent=55 // pred_check_branch
        %853 = sbr.rel (%p851) target = $region60
      $region59: #{basic_block_forward.4} parent=55 // pred_region
        %p854 = scmp.lt.s32.totalorder %s25, 1
        %s855 = scalar_select %p854, %s25, 1
        %p856 = scmp.lt.s32.totalorder %s26, 1
        %s857 = scalar_select %p856, %s26, 1
        %s858 = smul.addr %s855, 2
        %s859 = sadd.s32 %s857, %s858
        %s860 = smul.addr %s859, 8
        %s861 = scalar_lea.vmem %s6, %s860
      $region60: #{basic_block_forward.4} parent=55 // pred_fallthru
        _
      // Predicated region
      $region61: #{basic_block_forward.4} parent=55 // pred_check
        %p862 = pneg %p246
      $region62: #{basic_block_forward.4} parent=55 // pred_check_branch
        %864 = sbr.rel (%p862) target = $region64
      $region63: #{basic_block_forward.4} parent=55 // pred_region
        %s865 = smul.u32 %s25, 2
        %s866 = sadd.s32 %s865, %s26
        %p867 = scmp.lt.s32.totalorder %s866, 3
        %s868 = scalar_select %p867, %s866, 3
        %s869 = smul.addr %s868, 2
        %s870 = scalar_lea.vmem %s7, %s869
      $region64: #{basic_block_forward.4} parent=55 // pred_fallthru
        _
    $region56: #{basic_block_forward.4} parent=5 // pred_fallthru
      _
  $region6: #{basic_block_forward.4} parent=0 // loop_footer
    %s18 = sadd.s32 1, %s14
  $region7: #{basic_block_forward.4} parent=0 // loop_footer_branch
    %13 = sbr.rel target = $region3
  $region8: #{basic_block_forward.4} parent=0 // loop_exit
    _

// kernel: basic_block_forward.5
$region0: #{basic_block_forward.5}
  #allocation0 [shape = 'u32[]', space=smem, size = 0x4, offset = 0x4, fixed_abs, tag = 'smem constant byte address 0x4 - core index']
  #allocation1 [shape = 'u32[144,128]{1,0:T(1,128)}', space=vmem, size = 0x12000, scoped, tag = 'internal scratch']
  %s0 = inlined_call_operand.vmem [shape: f32[2,16,128], index: 0, kind: input, shape index: {}]
  %s1 = inlined_call_operand.vmem [shape: f32[1,128], index: 1, kind: input, shape index: {}]
  %s2 = inlined_call_operand.vmem [shape: f32[1,128], index: 2, kind: input, shape index: {}]
  %s3 = inlined_call_operand.vmem [shape: f32[2,16,128], index: 3, kind: output, shape index: {}]
  %s4 = sld [smem:[#allocation0]]
  $region45: #{basic_block_forward.5} parent=0
    _
  %s6 = ssub.s32 1, %s4
  %s7 = scalar_select 0, %s6, %s4
  loop: start=0, step=1, limit=6
  $region2: #{basic_block_forward.5} parent=0 // loop_pre_header
    _
  $region3: #{basic_block_forward.5} parent=0 // loop_header
    %s9 = sphi 0, %s13
    %p10 = scmp.ge.s32.totalorder %s9, 6
    %s16 = sphi 0, %s28
    %s17 = sphi 0, %s24
    %s18 = sphi 0, %s16
    %s19 = sphi 0, %s17
    %s20 = sphi 0, %s18
    %s21 = sphi 0, %s19
    %s33 = sphi 0, %s35
    %s36 = sphi 0, %s33
    %s37 = sphi 0, %s36
    %s53 = sphi 0, %s37
    %s57 = sphi 0, %s57
    %s59 = sphi 0, %s57
    %s60 = sphi 0, %s59
    %s74 = sphi 0, %s60
    %s78 = sphi 0, %s78
    %s80 = sphi 0, %s78
    %s81 = sphi 0, %s80
    %s95 = sphi 0, %s81
    %s103 = sphi 0, %s105
    %s106 = sphi 0, %s103
    %s107 = sphi 0, %s106
    %s123 = sphi 0, %s107
  $region4: #{basic_block_forward.5} parent=0 // loop_header_branch
    %12 = sbr.rel (%p10) target = $region8
  $region5: #{basic_block_forward.5} parent=0 // loop_body
    %s14 = ssub.s32 %s9, 1
    %s15 = ssub.s32 %s9, 2
    %s22 = sadd.s32 1, %s17
    %p23 = scmp.ge.s32.totalorder %s22, 2
    %s24 = scalar_select %p23, 0, %s22
    %s25 = sadd.s32 1, %s16
    %s26 = scalar_select %p23, %s25, %s16
    %p27 = scmp.ge.s32.totalorder %s26, 2
    %s28 = scalar_select %p27, 0, %s26
    %s29 = ssub.s32 %s16, %s28
    %s30 = ssub.s32 %s17, %s24
    %s31 = sor.u32 %s29, %s30
    %p32 = scmp.eq.s32.totalorder %s31, 0
    %s34 = sadd.s32 %s33, 1
    %s35 = scalar_select %p32, %s33, %s34
    %p38 = pneg %p32
    %p39 = scmp.eq.s32.totalorder %s9, 3
    %p40 = por %p38, %p39
    %p41 = scmp.ne.s32.totalorder %s33, %s36
    %p42 = scmp.eq.s32.totalorder %s9, 0
    %p43 = por %p41, %p42
    %p44 = scmp.ne.s32.totalorder %s33, %s36
    %p45 = scmp.eq.s32.totalorder %s14, 3
    %p46 = por %p44, %p45
    %p47 = scmp.ne.s32.totalorder %s36, %s37
    %p48 = scmp.eq.s32.totalorder %s14, 0
    %p49 = por %p47, %p48
    %p50 = scmp.ne.s32.totalorder %s36, %s37
    %p51 = scmp.eq.s32.totalorder %s15, 3
    %p52 = por %p50, %p51
    %p54 = scmp.ne.s32.totalorder %s37, %s53
    %p55 = scmp.eq.s32.totalorder %s15, 0
    %p56 = por %p54, %p55
    %s58 = sadd.s32 %s57, 1
    %p61 = scmp.eq.s32.totalorder %s9, 3
    %p62 = scmp.ne.s32.totalorder %s57, %s59
    %p63 = scmp.eq.s32.totalorder %s9, 0
    %p64 = por %p62, %p63
    %p65 = scmp.ne.s32.totalorder %s57, %s59
    %p66 = scmp.eq.s32.totalorder %s14, 3
    %p67 = por %p65, %p66
    %p68 = scmp.ne.s32.totalorder %s59, %s60
    %p69 = scmp.eq.s32.totalorder %s14, 0
    %p70 = por %p68, %p69
    %p71 = scmp.ne.s32.totalorder %s59, %s60
    %p72 = scmp.eq.s32.totalorder %s15, 3
    %p73 = por %p71, %p72
    %p75 = scmp.ne.s32.totalorder %s60, %s74
    %p76 = scmp.eq.s32.totalorder %s15, 0
    %p77 = por %p75, %p76
    %s79 = sadd.s32 %s78, 1
    %p82 = scmp.eq.s32.totalorder %s9, 3
    %p83 = scmp.ne.s32.totalorder %s78, %s80
    %p84 = scmp.eq.s32.totalorder %s9, 0
    %p85 = por %p83, %p84
    %p86 = scmp.ne.s32.totalorder %s78, %s80
    %p87 = scmp.eq.s32.totalorder %s14, 3
    %p88 = por %p86, %p87
    %p89 = scmp.ne.s32.totalorder %s80, %s81
    %p90 = scmp.eq.s32.totalorder %s14, 0
    %p91 = por %p89, %p90
    %p92 = scmp.ne.s32.totalorder %s80, %s81
    %p93 = scmp.eq.s32.totalorder %s15, 3
    %p94 = por %p92, %p93
    %p96 = scmp.ne.s32.totalorder %s81, %s95
    %p97 = scmp.eq.s32.totalorder %s15, 0
    %p98 = por %p96, %p97
    %s99 = ssub.s32 %s16, %s28
    %s100 = ssub.s32 %s17, %s24
    %s101 = sor.u32 %s99, %s100
    %p102 = scmp.eq.s32.totalorder %s101, 0
    %s104 = sadd.s32 %s103, 1
    %s105 = scalar_select %p102, %s103, %s104
    %p108 = pneg %p102
    %p109 = scmp.eq.s32.totalorder %s9, 3
    %p110 = por %p108, %p109
    %p111 = scmp.ne.s32.totalorder %s103, %s106
    %p112 = scmp.eq.s32.totalorder %s9, 0
    %p113 = por %p111, %p112
    %p114 = scmp.ne.s32.totalorder %s103, %s106
    %p115 = scmp.eq.s32.totalorder %s14, 3
    %p116 = por %p114, %p115
    %p117 = scmp.ne.s32.totalorder %s106, %s107
    %p118 = scmp.eq.s32.totalorder %s14, 0
    %p119 = por %p117, %p118
    %p120 = scmp.ne.s32.totalorder %s106, %s107
    %p121 = scmp.eq.s32.totalorder %s15, 3
    %p122 = por %p120, %p121
    %p124 = scmp.ne.s32.totalorder %s107, %s123
    %p125 = scmp.eq.s32.totalorder %s15, 0
    %p126 = por %p124, %p125
    %p127 = scmp.le.s32.totalorder 1, %s9
    %p128 = scmp.lt.s32.totalorder %s9, 5
    %p129 = pnand %p127, %p128
    %p130 = pneg %p129
    // Predicated region
    $region9: #{basic_block_forward.5} parent=5 // pred_check
      _
    $region10: #{basic_block_forward.5} parent=5 // pred_check_branch
      %132 = sbr.rel (%p129) target = $region12
    $region11: #{basic_block_forward.5} parent=5 // pred_region
      %s133 = ssub.s32 %s9, 1
      // Predicated region
      $region13: #{basic_block_forward.5} parent=11 // pred_check
        %p134 = pneg %p70
      $region14: #{basic_block_forward.5} parent=11 // pred_check_branch
        %136 = sbr.rel (%p134) target = $region16
      $region15: #{basic_block_forward.5} parent=11 // pred_region
        _
      $region16: #{basic_block_forward.5} parent=11 // pred_fallthru
        _
      // Predicated region
      $region17: #{basic_block_forward.5} parent=11 // pred_check
        %p137 = pneg %p91
      $region18: #{basic_block_forward.5} parent=11 // pred_check_branch
        %139 = sbr.rel (%p137) target = $region20
      $region19: #{basic_block_forward.5} parent=11 // pred_region
        _
      $region20: #{basic_block_forward.5} parent=11 // pred_fallthru
        _
    $region12: #{basic_block_forward.5} parent=5 // pred_fallthru
      _
    %p140 = scmp.lt.s32.totalorder %s9, 4
    // Predicated region
    $region21: #{basic_block_forward.5} parent=5 // pred_check
      %p141 = pneg %p140
    $region22: #{basic_block_forward.5} parent=5 // pred_check_branch
      %143 = sbr.rel (%p141) target = $region24
    $region23: #{basic_block_forward.5} parent=5 // pred_region
      // Predicated region
      $region25: #{basic_block_forward.5} parent=23 // pred_check
        %p144 = pneg %p43
      $region26: #{basic_block_forward.5} parent=23 // pred_check_branch
        %146 = sbr.rel (%p144) target = $region28
      $region27: #{basic_block_forward.5} parent=23 // pred_region
        %p147 = scmp.lt.s32.totalorder %s16, 1
        %s148 = scalar_select %p147, %s16, 1
        %p149 = scmp.lt.s32.totalorder %s17, 1
        %s150 = scalar_select %p149, %s17, 1
        %s151 = smul.addr %s148, 2
        %s152 = sadd.s32 %s150, %s151
        %s153 = smul.addr %s152, 8
        %s154 = scalar_lea.vmem %s0, %s153
      $region28: #{basic_block_forward.5} parent=23 // pred_fallthru
        _
    $region24: #{basic_block_forward.5} parent=5 // pred_fallthru
      _
    %p155 = scmp.le.s32.totalorder 1, %s9
    %p156 = scmp.lt.s32.totalorder %s9, 5
    %p157 = pnand %p155, %p156
    %p158 = pneg %p157
    // Predicated region
    $region29: #{basic_block_forward.5} parent=5 // pred_check
      _
    $region30: #{basic_block_forward.5} parent=5 // pred_check_branch
      %160 = sbr.rel (%p157) target = $region32
    $region31: #{basic_block_forward.5} parent=5 // pred_region
      %s161 = ssub.s32 %s9, 1
      %p162 = scmp.lt.s32.totalorder %s18, 1
      %s163 = scalar_select %p162, %s18, 1
      %p164 = scmp.lt.s32.totalorder %s19, 1
      %s165 = scalar_select %p164, %s19, 1
      %s166 = smul.addr %s163, 2
      %s167 = sadd.s32 %s165, %s166
      %s168 = smul.addr %s167, 8
      %s169 = scalar_lea.vmem %s0, %s168
      %p170 = pneg %p49
      %p171 = pneg %p46
      %p172 = pneg %p70
      %p173 = pneg %p67
      %p174 = pneg %p91
      %p175 = pneg %p88
      %p176 = pneg %p119
      %p177 = pneg %p116
      %p178 = scmp.lt.s32.totalorder %s18, 1
      %s179 = scalar_select %p178, %s18, 1
      %p180 = scmp.lt.s32.totalorder %s19, 1
      %s181 = scalar_select %p180, %s19, 1
      %s182 = smul.addr %s179, 2
      %s183 = sadd.s32 %s181, %s182
      %s184 = smul.addr %s183, 8
      %s185 = scalar_lea.vmem %s3, %s184
      %p186 = scmp.lt.s32.totalorder %s18, 1
      %s187 = scalar_select %p186, %s18, 1
      %p188 = scmp.lt.s32.totalorder %s19, 1
      %s189 = scalar_select %p188, %s19, 1
      %s190 = smul.addr %s187, 2
      %s191 = sadd.s32 %s189, %s190
      %s192 = smul.addr %s191, 8
      %s193 = scalar_lea.vmem %s0, %s192
      %p194 = scmp.lt.s32.totalorder %s18, 1
      %s195 = scalar_select %p194, %s18, 1
      %p196 = scmp.lt.s32.totalorder %s19, 1
      %s197 = scalar_select %p196, %s19, 1
      %s198 = smul.addr %s195, 2
      %s199 = sadd.s32 %s197, %s198
      %s200 = smul.addr %s199, 8
      %s201 = scalar_lea.vmem %s3, %s200
      %v202 = vld [vmem:[%s193] sm:$0xff]
      %v203 = vld [vmem:[%s1] sm:$0x1]
      %v205 = vlaneseq
      %v206 = vshrl.u32 %v205, 7
      %v207 = vsub.s32 0, %v206
      %v208 = vrot.slane %v203, %v207
      %v210 = vmul.f32 %v202, %v208
      %v211 = vld [vmem:[%s2] sm:$0x1]
      %v213 = vlaneseq
      %v214 = vshrl.u32 %v213, 7
      %v215 = vsub.s32 0, %v214
      %v216 = vrot.slane %v211, %v215
      %v218 = vadd.f32 %v210, %v216
      %v219 = vmax.f32 %v218, 0.0
      %220 = vst [vmem:[%s201] sm:$0xff] %v219
      %p221 = scmp.lt.s32.totalorder %s18, 1
      %s222 = scalar_select %p221, %s18, 1
      %p223 = scmp.lt.s32.totalorder %s19, 1
      %s224 = scalar_select %p223, %s19, 1
      %s225 = smul.addr %s222, 2
      %s226 = sadd.s32 %s224, %s225
      %s227 = smul.addr %s226, 8
      %s228 = scalar_lea.vmem %s3, %s227
      // Predicated region
      $region33: #{basic_block_forward.5} parent=31 // pred_check
        %p229 = pneg %p116
      $region34: #{basic_block_forward.5} parent=31 // pred_check_branch
        %231 = sbr.rel (%p229) target = $region36
      $region35: #{basic_block_forward.5} parent=31 // pred_region
        _
      $region36: #{basic_block_forward.5} parent=31 // pred_fallthru
        _
    $region32: #{basic_block_forward.5} parent=5 // pred_fallthru
      _
    %p232 = scmp.le.s32.totalorder 2, %s9
    // Predicated region
    $region37: #{basic_block_forward.5} parent=5 // pred_check
      %p233 = pneg %p232
    $region38: #{basic_block_forward.5} parent=5 // pred_check_branch
      %235 = sbr.rel (%p233) target = $region40
    $region39: #{basic_block_forward.5} parent=5 // pred_region
      %s236 = ssub.s32 %s9, 2
      // Predicated region
      $region41: #{basic_block_forward.5} parent=39 // pred_check
        %p237 = pneg %p122
      $region42: #{basic_block_forward.5} parent=39 // pred_check_branch
        %239 = sbr.rel (%p237) target = $region44
      $region43: #{basic_block_forward.5} parent=39 // pred_region
        %p240 = scmp.lt.s32.totalorder %s20, 1
        %s241 = scalar_select %p240, %s20, 1
        %p242 = scmp.lt.s32.totalorder %s21, 1
        %s243 = scalar_select %p242, %s21, 1
        %s244 = smul.addr %s241, 2
        %s245 = sadd.s32 %s243, %s244
        %s246 = smul.addr %s245, 8
        %s247 = scalar_lea.vmem %s3, %s246
      $region44: #{basic_block_forward.5} parent=39 // pred_fallthru
        _
    $region40: #{basic_block_forward.5} parent=5 // pred_fallthru
      _
  $region6: #{basic_block_forward.5} parent=0 // loop_footer
    %s13 = sadd.s32 1, %s9
  $region7: #{basic_block_forward.5} parent=0 // loop_footer_branch
    %8 = sbr.rel target = $region3
  $region8: #{basic_block_forward.5} parent=0 // loop_exit
    _

</llo_original>
